<compile_context>
chip_gen: v5e
topology: v5e:2x2
jax: 0.10.0
libtpu: 0.0.40
codegen_flags: <defaults>
</compile_context>

<pallas_src>
import functools

import jax
import jax.numpy as jnp
from jax.experimental import pallas as pl
from jax.experimental.pallas import tpu as pltpu


def _se_scale_kernel(gate_ref, x_ref, o_ref, *, tc):
    # gate_ref: (rows, 1)  -- resident in VMEM for the whole grid
    # x_ref:    (tc, HW)   -- feature tile for this grid step
    # o_ref:    (tc, HW)
    start = pl.multiple_of(pl.program_id(0) * tc, 8)
    g = jax.nn.sigmoid(gate_ref[pl.ds(start, tc), :].astype(jnp.float32))
    o_ref[...] = (x_ref[...].astype(jnp.float32) * g).astype(o_ref.dtype)


def _pick_channel_tile(rows, hw, itemsize, max_block_bytes=8 << 20):
    """Prefer a 2-step grid (dual-TC on v7x); add steps only if a block would be huge."""
    hw_padded = pl.cdiv(hw, 128) * 128  # lane padding in VMEM
    for steps in (2, 4, 8, 16, 32):
        if rows % steps == 0:
            tc = rows // steps
            if tc % 8 == 0 and tc * hw_padded * itemsize <= max_block_bytes:
                return tc
    return rows  # single full block


def sigmoid_mul(x_gate, x_feat):
    """x_gate: (N, C, 1, 1), x_feat: (N, C, H, W)  ->  sigmoid(x_gate) * x_feat."""
    N, C, H, W = x_feat.shape
    assert x_gate.shape == (N, C, 1, 1)
    rows = N * C
    hw = H * W
    itemsize = jnp.dtype(x_feat.dtype).itemsize

    tc = _pick_channel_tile(rows, hw, itemsize)
    grid = rows // tc

    gate2d = x_gate.reshape(rows, 1)
    feat2d = x_feat.reshape(rows, hw)

    # TODO(synk): if the surrounding graph ever supplies NHWC (C on the lane axis)
    # or bf16 activations, switch the 2D view / dtype to cut lane padding and HBM bytes.
    cost = pl.CostEstimate(
        flops=rows * hw,                                  # one multiply per element
        transcendentals=rows,                             # one sigmoid per channel
        bytes_accessed=(2 * rows * hw + rows) * itemsize  # feat in + out + gate
    )

    out2d = pl.pallas_call(
        functools.partial(_se_scale_kernel, tc=tc),
        out_shape=jax.ShapeDtypeStruct((rows, hw), x_feat.dtype),
        grid_spec=pltpu.PrefetchScalarGridSpec(
            num_scalar_prefetch=0,
            grid=(grid,),
            in_specs=[
                # Gate: full array, constant index_map -> stays resident in VMEM.
                pl.BlockSpec((rows, 1), lambda i: (0, 0)),
                # Feature tile per grid step.
                pl.BlockSpec((tc, hw), lambda i: (i, 0)),
            ],
            out_specs=pl.BlockSpec((tc, hw), lambda i: (i, 0)),
        ),
        compiler_params=pltpu.CompilerParams(
            dimension_semantics=("parallel",),
        ),
        cost_estimate=cost,
    )(gate2d, feat2d)

    return out2d.reshape(N, C, H, W)


if __name__ == "__main__":
    key = jax.random.PRNGKey(0)
    k1, k2 = jax.random.split(key)

    # Shapes from the module's forward (NCHW); total data is small (~0.8 MB).
    N, C, H, W = 1, 1056, 14, 14
    x358 = jax.random.normal(k1, (N, C, H, W), dtype=jnp.float32)   # feature map
    x362 = jax.random.normal(k2, (N, C, 1, 1), dtype=jnp.float32)   # SE gate logits

    out = jax.block_until_ready(sigmoid_mul(x362, x358))

    # Reference check in plain JAX.
    ref = jax.nn.sigmoid(x362) * x358
    assert out.shape == (N, C, H, W)
    assert jnp.allclose(out, ref, atol=1e-6, rtol=1e-6)

    print("KERNEL_OK")
</pallas_src>

<mosaic_0001>
module attributes {stable_mosaic.version = 11 : i64} {
  func.func @_se_scale_kernel(%arg0: i32, %arg1: memref<1056x1xf32, #tpu.memory_space<vmem>>, %arg2: memref<528x196xf32, #tpu.memory_space<vmem>>, %arg3: memref<528x196xf32, #tpu.memory_space<vmem>>) attributes {dimension_semantics = [#tpu.dimension_semantics<parallel>], iteration_bounds = array<i64: 2>, scalar_prefetch = 0 : i64, scratch_operands = 0 : i64, tpu.core_type = #tpu.core_type<tc>, window_params = [{pipeline_mode = #tpu.pipeline_mode<synchronous>, transform_indices = @transform_0, window_bounds = array<i64: 1056, 1>}, {transform_indices = @transform_1, window_bounds = array<i64: 528, 196>}, {transform_indices = @transform_2, window_bounds = array<i64: 528, 196>}]} {
    %c528_i32 = arith.constant 528 : i32
    %0 = arith.muli %arg0, %c528_i32 : i32
    %1 = tpu.assume_multiple %0, 8 : i32
    %2 = arith.index_cast %1 : i32 to index
    %c0 = arith.constant 0 : index
    %3 = vector.load %arg1[%2, %c0] : memref<1056x1xf32, #tpu.memory_space<vmem>>, vector<528x1xf32>
    %4 = arith.negf %3 : vector<528x1xf32>
    %5 = math.exp %4 : vector<528x1xf32>
    %cst = arith.constant 1.000000e+00 : f32
    %6 = vector.broadcast %cst : f32 to vector<528x1xf32>
    %7 = arith.addf %6, %5 : vector<528x1xf32>
    %8 = arith.divf %6, %7 : vector<528x1xf32>
    %c0_0 = arith.constant 0 : index
    %c0_1 = arith.constant 0 : index
    %9 = vector.load %arg2[%c0_0, %c0_1] : memref<528x196xf32, #tpu.memory_space<vmem>>, vector<528x196xf32>
    %10 = vector.broadcast %8 : vector<528x1xf32> to vector<528x196xf32>
    %11 = arith.mulf %9, %10 : vector<528x196xf32>
    %c0_2 = arith.constant 0 : index
    %c0_3 = arith.constant 0 : index
    %12 = vector.load %arg3[%c0_2, %c0_3] : memref<528x196xf32, #tpu.memory_space<vmem>>, vector<528x196xf32>
    tpu.vector_store %arg3[%c0_2, %c0_3], %11 {strides = array<i32>} : memref<528x196xf32, #tpu.memory_space<vmem>>, vector<528x196xf32>,
    return
  }
  func.func @transform_0(%arg0: i32) -> (i32, i32) {
    %c0_i32 = arith.constant 0 : i32
    %c0_i32_0 = arith.constant 0 : i32
    %c0_i32_1 = arith.constant 0 : i32
    return %c0_i32, %c0_i32_0 : i32, i32
  }
  func.func @transform_1(%arg0: i32) -> (i32, i32) {
    %c0_i32 = arith.constant 0 : i32
    %c0_i32_0 = arith.constant 0 : i32
    return %arg0, %c0_i32 : i32, i32
  }
  func.func @transform_2(%arg0: i32) -> (i32, i32) {
    %c0_i32 = arith.constant 0 : i32
    %c0_i32_0 = arith.constant 0 : i32
    return %arg0, %c0_i32 : i32, i32
  }
}

</mosaic_0001>

<llo_original>
// kernel: tpu_custom_call.1
$region0: #{tpu_custom_call.1}
  #allocation0 [shape = 'u32[]', space=smem, size = 0x4, offset = 0x4, fixed_abs, tag = 'smem constant byte address 0x4 - core index']
  #allocation1 [shape = 'u32[72,128]{1,0:T(1,128)}', space=vmem, size = 0x9000, scoped, tag = 'internal scratch']
  %s0 = inlined_call_operand.vmem [shape: f32[1056,1], index: 0, kind: input, shape index: {}]
  %s1 = inlined_call_operand.vmem [shape: f32[1056,196], index: 1, kind: input, shape index: {}]
  %s2 = inlined_call_operand.vmem [shape: f32[1056,196], index: 2, kind: output, shape index: {}]
  %s3 = sld [smem:[#allocation0]]
  $region41: #{tpu_custom_call.1} parent=0
    _
  %s5 = ssub.s32 1, %s3
  %s6 = scalar_select 0, %s5, %s3
  loop: start=0, step=1, limit=4
  $region2: #{tpu_custom_call.1} parent=0 // loop_pre_header
    _
  $region3: #{tpu_custom_call.1} parent=0 // loop_header
    %s8 = sphi 0, %s12
    %p9 = scmp.ge.s32.totalorder %s8, 4
    %s16 = sphi 0, %s16
    %s18 = sphi 0, %s16
    %s19 = sphi 0, %s18
    %s33 = sphi 0, %s19
    %s39 = sphi 0, %s41
    %s42 = sphi 0, %s39
    %s43 = sphi 0, %s42
    %s59 = sphi 0, %s43
    %s65 = sphi 0, %s67
    %s68 = sphi 0, %s65
    %s69 = sphi 0, %s68
    %s85 = sphi 0, %s69
  $region4: #{tpu_custom_call.1} parent=0 // loop_header_branch
    %11 = sbr.rel (%p9) target = $region8
  $region5: #{tpu_custom_call.1} parent=0 // loop_body
    %s13 = ssub.s32 %s8, 1
    %s14 = ssub.s32 %s8, 2
    %s15 = sadd.s32 %s8, 1
    %s17 = sadd.s32 %s16, 1
    %p20 = scmp.eq.s32.totalorder %s8, 1
    %p21 = scmp.ne.s32.totalorder %s16, %s18
    %p22 = scmp.eq.s32.totalorder %s8, 0
    %p23 = por %p21, %p22
    %p24 = scmp.ne.s32.totalorder %s16, %s18
    %p25 = scmp.eq.s32.totalorder %s13, 1
    %p26 = por %p24, %p25
    %p27 = scmp.ne.s32.totalorder %s18, %s19
    %p28 = scmp.eq.s32.totalorder %s13, 0
    %p29 = por %p27, %p28
    %p30 = scmp.ne.s32.totalorder %s18, %s19
    %p31 = scmp.eq.s32.totalorder %s14, 1
    %p32 = por %p30, %p31
    %p34 = scmp.ne.s32.totalorder %s19, %s33
    %p35 = scmp.eq.s32.totalorder %s14, 0
    %p36 = por %p34, %p35
    %s37 = ssub.s32 %s8, %s15
    %p38 = scmp.eq.s32.totalorder %s37, 0
    %s40 = sadd.s32 %s39, 1
    %s41 = scalar_select %p38, %s39, %s40
    %p44 = pneg %p38
    %p45 = scmp.eq.s32.totalorder %s8, 1
    %p46 = por %p44, %p45
    %p47 = scmp.ne.s32.totalorder %s39, %s42
    %p48 = scmp.eq.s32.totalorder %s8, 0
    %p49 = por %p47, %p48
    %p50 = scmp.ne.s32.totalorder %s39, %s42
    %p51 = scmp.eq.s32.totalorder %s13, 1
    %p52 = por %p50, %p51
    %p53 = scmp.ne.s32.totalorder %s42, %s43
    %p54 = scmp.eq.s32.totalorder %s13, 0
    %p55 = por %p53, %p54
    %p56 = scmp.ne.s32.totalorder %s42, %s43
    %p57 = scmp.eq.s32.totalorder %s14, 1
    %p58 = por %p56, %p57
    %p60 = scmp.ne.s32.totalorder %s43, %s59
    %p61 = scmp.eq.s32.totalorder %s14, 0
    %p62 = por %p60, %p61
    %s63 = ssub.s32 %s8, %s15
    %p64 = scmp.eq.s32.totalorder %s63, 0
    %s66 = sadd.s32 %s65, 1
    %s67 = scalar_select %p64, %s65, %s66
    %p70 = pneg %p64
    %p71 = scmp.eq.s32.totalorder %s8, 1
    %p72 = por %p70, %p71
    %p73 = scmp.ne.s32.totalorder %s65, %s68
    %p74 = scmp.eq.s32.totalorder %s8, 0
    %p75 = por %p73, %p74
    %p76 = scmp.ne.s32.totalorder %s65, %s68
    %p77 = scmp.eq.s32.totalorder %s13, 1
    %p78 = por %p76, %p77
    %p79 = scmp.ne.s32.totalorder %s68, %s69
    %p80 = scmp.eq.s32.totalorder %s13, 0
    %p81 = por %p79, %p80
    %p82 = scmp.ne.s32.totalorder %s68, %s69
    %p83 = scmp.eq.s32.totalorder %s14, 1
    %p84 = por %p82, %p83
    %p86 = scmp.ne.s32.totalorder %s69, %s85
    %p87 = scmp.eq.s32.totalorder %s14, 0
    %p88 = por %p86, %p87
    %p89 = scmp.le.s32.totalorder 1, %s8
    %p90 = scmp.lt.s32.totalorder %s8, 3
    %p91 = pnand %p89, %p90
    %p92 = pneg %p91
    // Predicated region
    $region9: #{tpu_custom_call.1} parent=5 // pred_check
      _
    $region10: #{tpu_custom_call.1} parent=5 // pred_check_branch
      %94 = sbr.rel (%p91) target = $region12
    $region11: #{tpu_custom_call.1} parent=5 // pred_region
      %s95 = ssub.s32 %s8, 1
      // Predicated region
      $region13: #{tpu_custom_call.1} parent=11 // pred_check
        %p96 = pneg %p29
      $region14: #{tpu_custom_call.1} parent=11 // pred_check_branch
        %98 = sbr.rel (%p96) target = $region16
      $region15: #{tpu_custom_call.1} parent=11 // pred_region
        _
      $region16: #{tpu_custom_call.1} parent=11 // pred_fallthru
        _
    $region12: #{tpu_custom_call.1} parent=5 // pred_fallthru
      _
    %p99 = scmp.lt.s32.totalorder %s8, 2
    // Predicated region
    $region17: #{tpu_custom_call.1} parent=5 // pred_check
      %p100 = pneg %p99
    $region18: #{tpu_custom_call.1} parent=5 // pred_check_branch
      %102 = sbr.rel (%p100) target = $region20
    $region19: #{tpu_custom_call.1} parent=5 // pred_region
      // Predicated region
      $region21: #{tpu_custom_call.1} parent=19 // pred_check
        %p103 = pneg %p49
      $region22: #{tpu_custom_call.1} parent=19 // pred_check_branch
        %105 = sbr.rel (%p103) target = $region24
      $region23: #{tpu_custom_call.1} parent=19 // pred_region
        %s106 = smul.u32 66, %s8
        %p107 = scmp.lt.s32.totalorder %s106, 131
        %s108 = scalar_select %p107, %s106, 131
        %s109 = smul.addr %s108, 2
        %s110 = smul.addr %s109, 8
        %s111 = scalar_lea.vmem %s1, %s110
        %s112 = smul.u32 66, %s8
      $region24: #{tpu_custom_call.1} parent=19 // pred_fallthru
        _
    $region20: #{tpu_custom_call.1} parent=5 // pred_fallthru
      _
    %p113 = scmp.le.s32.totalorder 1, %s8
    %p114 = scmp.lt.s32.totalorder %s8, 3
    %p115 = pnand %p113, %p114
    %p116 = pneg %p115
    // Predicated region
    $region25: #{tpu_custom_call.1} parent=5 // pred_check
      _
    $region26: #{tpu_custom_call.1} parent=5 // pred_check_branch
      %118 = sbr.rel (%p115) target = $region28
    $region27: #{tpu_custom_call.1} parent=5 // pred_region
      %s119 = ssub.s32 %s8, 1
      %p120 = pneg %p29
      %p121 = pneg %p26
      %s122 = smul.u32 66, %s13
      %p123 = scmp.lt.s32.totalorder %s122, 131
      %s124 = scalar_select %p123, %s122, 131
      %s125 = smul.addr %s124, 2
      %s126 = smul.addr %s125, 8
      %s127 = scalar_lea.vmem %s1, %s126
      %p128 = pneg %p55
      %p129 = pneg %p52
      %p130 = pneg %p81
      %p131 = pneg %p78
      %s132 = smul.u32 66, %s13
      %p133 = scmp.lt.s32.totalorder %s132, 131
      %s134 = scalar_select %p133, %s132, 131
      %s135 = smul.addr %s134, 2
      %s136 = smul.addr %s135, 8
      %s137 = scalar_lea.vmem %s2, %s136
      %s138 = smul.u32 66, %s13
      %p139 = scmp.lt.s32.totalorder %s138, 131
      %s140 = scalar_select %p139, %s138, 131
      %s141 = smul.addr %s140, 2
      %s142 = smul.addr %s141, 8
      %s143 = scalar_lea.vmem %s1, %s142
      %s144 = smul.u32 66, %s13
      %s145 = smul.u32 66, %s13
      %p146 = scmp.lt.s32.totalorder %s145, 131
      %s147 = scalar_select %p146, %s145, 131
      %s148 = smul.addr %s147, 2
      %s149 = smul.addr %s148, 8
      %s150 = scalar_lea.vmem %s2, %s149
      %s151 = smul.u32 66, %s13
      %s152 = smul.u32 %s13, 528
      %s153 = scalar_lea.vmem %s0, %s152
      %v154 = vld [vmem:[%s153] sm:$0xff]
      %v155 = vld [vmem:[%s153 + $0x8] sm:$0xff]
      %v156 = vld [vmem:[%s153 + $0x10] sm:$0xff]
      %v157 = vld [vmem:[%s153 + $0x18] sm:$0xff]
      %v158 = vld [vmem:[%s153 + $0x20] sm:$0xff]
      %v159 = vld [vmem:[%s153 + $0x28] sm:$0xff]
      %v160 = vld [vmem:[%s153 + $0x30] sm:$0xff]
      %v161 = vld [vmem:[%s153 + $0x38] sm:$0xff]
      %v162 = vld [vmem:[%s153 + $0x40] sm:$0xff]
      %v163 = vld [vmem:[%s153 + $0x48] sm:$0xff]
      %v164 = vld [vmem:[%s153 + $0x50] sm:$0xff]
      %v165 = vld [vmem:[%s153 + $0x58] sm:$0xff]
      %v166 = vld [vmem:[%s153 + $0x60] sm:$0xff]
      %v167 = vld [vmem:[%s153 + $0x68] sm:$0xff]
      %v168 = vld [vmem:[%s153 + $0x70] sm:$0xff]
      %v169 = vld [vmem:[%s153 + $0x78] sm:$0xff]
      %v170 = vld [vmem:[%s153 + $0x80] sm:$0xff]
      %v171 = vld [vmem:[%s153 + $0x88] sm:$0xff]
      %v172 = vld [vmem:[%s153 + $0x90] sm:$0xff]
      %v173 = vld [vmem:[%s153 + $0x98] sm:$0xff]
      %v174 = vld [vmem:[%s153 + $0xa0] sm:$0xff]
      %v175 = vld [vmem:[%s153 + $0xa8] sm:$0xff]
      %v176 = vld [vmem:[%s153 + $0xb0] sm:$0xff]
      %v177 = vld [vmem:[%s153 + $0xb8] sm:$0xff]
      %v178 = vld [vmem:[%s153 + $0xc0] sm:$0xff]
      %v179 = vld [vmem:[%s153 + $0xc8] sm:$0xff]
      %v180 = vld [vmem:[%s153 + $0xd0] sm:$0xff]
      %v181 = vld [vmem:[%s153 + $0xd8] sm:$0xff]
      %v182 = vld [vmem:[%s153 + $0xe0] sm:$0xff]
      %v183 = vld [vmem:[%s153 + $0xe8] sm:$0xff]
      %v184 = vld [vmem:[%s153 + $0xf0] sm:$0xff]
      %v185 = vld [vmem:[%s153 + $0xf8] sm:$0xff]
      %v186 = vld [vmem:[%s153 + $0x100] sm:$0xff]
      %v187 = vld [vmem:[%s153 + $0x108] sm:$0xff]
      %v188 = vld [vmem:[%s153 + $0x110] sm:$0xff]
      %v189 = vld [vmem:[%s153 + $0x118] sm:$0xff]
      %v190 = vld [vmem:[%s153 + $0x120] sm:$0xff]
      %v191 = vld [vmem:[%s153 + $0x128] sm:$0xff]
      %v192 = vld [vmem:[%s153 + $0x130] sm:$0xff]
      %v193 = vld [vmem:[%s153 + $0x138] sm:$0xff]
      %v194 = vld [vmem:[%s153 + $0x140] sm:$0xff]
      %v195 = vld [vmem:[%s153 + $0x148] sm:$0xff]
      %v196 = vld [vmem:[%s153 + $0x150] sm:$0xff]
      %v197 = vld [vmem:[%s153 + $0x158] sm:$0xff]
      %v198 = vld [vmem:[%s153 + $0x160] sm:$0xff]
      %v199 = vld [vmem:[%s153 + $0x168] sm:$0xff]
      %v200 = vld [vmem:[%s153 + $0x170] sm:$0xff]
      %v201 = vld [vmem:[%s153 + $0x178] sm:$0xff]
      %v202 = vld [vmem:[%s153 + $0x180] sm:$0xff]
      %v203 = vld [vmem:[%s153 + $0x188] sm:$0xff]
      %v204 = vld [vmem:[%s153 + $0x190] sm:$0xff]
      %v205 = vld [vmem:[%s153 + $0x198] sm:$0xff]
      %v206 = vld [vmem:[%s153 + $0x1a0] sm:$0xff]
      %v207 = vld [vmem:[%s153 + $0x1a8] sm:$0xff]
      %v208 = vld [vmem:[%s153 + $0x1b0] sm:$0xff]
      %v209 = vld [vmem:[%s153 + $0x1b8] sm:$0xff]
      %v210 = vld [vmem:[%s153 + $0x1c0] sm:$0xff]
      %v211 = vld [vmem:[%s153 + $0x1c8] sm:$0xff]
      %v212 = vld [vmem:[%s153 + $0x1d0] sm:$0xff]
      %v213 = vld [vmem:[%s153 + $0x1d8] sm:$0xff]
      %v214 = vld [vmem:[%s153 + $0x1e0] sm:$0xff]
      %v215 = vld [vmem:[%s153 + $0x1e8] sm:$0xff]
      %v216 = vld [vmem:[%s153 + $0x1f0] sm:$0xff]
      %v217 = vld [vmem:[%s153 + $0x1f8] sm:$0xff]
      %v218 = vld [vmem:[%s153 + $0x200] sm:$0xff]
      %v219 = vld [vmem:[%s153 + $0x208] sm:$0xff]
      %v220 = vxor.u32 %v154, 2147483648
      %v221 = vxor.u32 %v155, 2147483648
      %v222 = vxor.u32 %v156, 2147483648
      %v223 = vxor.u32 %v157, 2147483648
      %v224 = vxor.u32 %v158, 2147483648
      %v225 = vxor.u32 %v159, 2147483648
      %v226 = vxor.u32 %v160, 2147483648
      %v227 = vxor.u32 %v161, 2147483648
      %v228 = vxor.u32 %v162, 2147483648
      %v229 = vxor.u32 %v163, 2147483648
      %v230 = vxor.u32 %v164, 2147483648
      %v231 = vxor.u32 %v165, 2147483648
      %v232 = vxor.u32 %v166, 2147483648
      %v233 = vxor.u32 %v167, 2147483648
      %v234 = vxor.u32 %v168, 2147483648
      %v235 = vxor.u32 %v169, 2147483648
      %v236 = vxor.u32 %v170, 2147483648
      %v237 = vxor.u32 %v171, 2147483648
      %v238 = vxor.u32 %v172, 2147483648
      %v239 = vxor.u32 %v173, 2147483648
      %v240 = vxor.u32 %v174, 2147483648
      %v241 = vxor.u32 %v175, 2147483648
      %v242 = vxor.u32 %v176, 2147483648
      %v243 = vxor.u32 %v177, 2147483648
      %v244 = vxor.u32 %v178, 2147483648
      %v245 = vxor.u32 %v179, 2147483648
      %v246 = vxor.u32 %v180, 2147483648
      %v247 = vxor.u32 %v181, 2147483648
      %v248 = vxor.u32 %v182, 2147483648
      %v249 = vxor.u32 %v183, 2147483648
      %v250 = vxor.u32 %v184, 2147483648
      %v251 = vxor.u32 %v185, 2147483648
      %v252 = vxor.u32 %v186, 2147483648
      %v253 = vxor.u32 %v187, 2147483648
      %v254 = vxor.u32 %v188, 2147483648
      %v255 = vxor.u32 %v189, 2147483648
      %v256 = vxor.u32 %v190, 2147483648
      %v257 = vxor.u32 %v191, 2147483648
      %v258 = vxor.u32 %v192, 2147483648
      %v259 = vxor.u32 %v193, 2147483648
      %v260 = vxor.u32 %v194, 2147483648
      %v261 = vxor.u32 %v195, 2147483648
      %v262 = vxor.u32 %v196, 2147483648
      %v263 = vxor.u32 %v197, 2147483648
      %v264 = vxor.u32 %v198, 2147483648
      %v265 = vxor.u32 %v199, 2147483648
      %v266 = vxor.u32 %v200, 2147483648
      %v267 = vxor.u32 %v201, 2147483648
      %v268 = vxor.u32 %v202, 2147483648
      %v269 = vxor.u32 %v203, 2147483648
      %v270 = vxor.u32 %v204, 2147483648
      %v271 = vxor.u32 %v205, 2147483648
      %v272 = vxor.u32 %v206, 2147483648
      %v273 = vxor.u32 %v207, 2147483648
      %v274 = vxor.u32 %v208, 2147483648
      %v275 = vxor.u32 %v209, 2147483648
      %v276 = vxor.u32 %v210, 2147483648
      %v277 = vxor.u32 %v211, 2147483648
      %v278 = vxor.u32 %v212, 2147483648
      %v279 = vxor.u32 %v213, 2147483648
      %v280 = vxor.u32 %v214, 2147483648
      %v281 = vxor.u32 %v215, 2147483648
      %v282 = vxor.u32 %v216, 2147483648
      %v283 = vxor.u32 %v217, 2147483648
      %v284 = vxor.u32 %v218, 2147483648
      %v285 = vxor.u32 %v219, 2147483648
      %v286 = vmul.f32 %v220, 1.442695
      %v287 = vpow.pop %v286
      %v288 = vmul.f32 %v221, 1.442695
      %v289 = vpow.pop %v288
      %v290 = vmul.f32 %v222, 1.442695
      %v291 = vpow.pop %v290
      %v292 = vmul.f32 %v223, 1.442695
      %v293 = vpow.pop %v292
      %v294 = vmul.f32 %v224, 1.442695
      %v295 = vpow.pop %v294
      %v296 = vmul.f32 %v225, 1.442695
      %v297 = vpow.pop %v296
      %v298 = vmul.f32 %v226, 1.442695
      %v299 = vpow.pop %v298
      %v300 = vmul.f32 %v227, 1.442695
      %v301 = vpow.pop %v300
      %v302 = vmul.f32 %v228, 1.442695
      %v303 = vpow.pop %v302
      %v304 = vmul.f32 %v229, 1.442695
      %v305 = vpow.pop %v304
      %v306 = vmul.f32 %v230, 1.442695
      %v307 = vpow.pop %v306
      %v308 = vmul.f32 %v231, 1.442695
      %v309 = vpow.pop %v308
      %v310 = vmul.f32 %v232, 1.442695
      %v311 = vpow.pop %v310
      %v312 = vmul.f32 %v233, 1.442695
      %v313 = vpow.pop %v312
      %v314 = vmul.f32 %v234, 1.442695
      %v315 = vpow.pop %v314
      %v316 = vmul.f32 %v235, 1.442695
      %v317 = vpow.pop %v316
      %v318 = vmul.f32 %v236, 1.442695
      %v319 = vpow.pop %v318
      %v320 = vmul.f32 %v237, 1.442695
      %v321 = vpow.pop %v320
      %v322 = vmul.f32 %v238, 1.442695
      %v323 = vpow.pop %v322
      %v324 = vmul.f32 %v239, 1.442695
      %v325 = vpow.pop %v324
      %v326 = vmul.f32 %v240, 1.442695
      %v327 = vpow.pop %v326
      %v328 = vmul.f32 %v241, 1.442695
      %v329 = vpow.pop %v328
      %v330 = vmul.f32 %v242, 1.442695
      %v331 = vpow.pop %v330
      %v332 = vmul.f32 %v243, 1.442695
      %v333 = vpow.pop %v332
      %v334 = vmul.f32 %v244, 1.442695
      %v335 = vpow.pop %v334
      %v336 = vmul.f32 %v245, 1.442695
      %v337 = vpow.pop %v336
      %v338 = vmul.f32 %v246, 1.442695
      %v339 = vpow.pop %v338
      %v340 = vmul.f32 %v247, 1.442695
      %v341 = vpow.pop %v340
      %v342 = vmul.f32 %v248, 1.442695
      %v343 = vpow.pop %v342
      %v344 = vmul.f32 %v249, 1.442695
      %v345 = vpow.pop %v344
      %v346 = vmul.f32 %v250, 1.442695
      %v347 = vpow.pop %v346
      %v348 = vmul.f32 %v251, 1.442695
      %v349 = vpow.pop %v348
      %v350 = vmul.f32 %v252, 1.442695
      %v351 = vpow.pop %v350
      %v352 = vmul.f32 %v253, 1.442695
      %v353 = vpow.pop %v352
      %v354 = vmul.f32 %v254, 1.442695
      %v355 = vpow.pop %v354
      %v356 = vmul.f32 %v255, 1.442695
      %v357 = vpow.pop %v356
      %v358 = vmul.f32 %v256, 1.442695
      %v359 = vpow.pop %v358
      %v360 = vmul.f32 %v257, 1.442695
      %v361 = vpow.pop %v360
      %v362 = vmul.f32 %v258, 1.442695
      %v363 = vpow.pop %v362
      %v364 = vmul.f32 %v259, 1.442695
      %v365 = vpow.pop %v364
      %v366 = vmul.f32 %v260, 1.442695
      %v367 = vpow.pop %v366
      %v368 = vmul.f32 %v261, 1.442695
      %v369 = vpow.pop %v368
      %v370 = vmul.f32 %v262, 1.442695
      %v371 = vpow.pop %v370
      %v372 = vmul.f32 %v263, 1.442695
      %v373 = vpow.pop %v372
      %v374 = vmul.f32 %v264, 1.442695
      %v375 = vpow.pop %v374
      %v376 = vmul.f32 %v265, 1.442695
      %v377 = vpow.pop %v376
      %v378 = vmul.f32 %v266, 1.442695
      %v379 = vpow.pop %v378
      %v380 = vmul.f32 %v267, 1.442695
      %v381 = vpow.pop %v380
      %v382 = vmul.f32 %v268, 1.442695
      %v383 = vpow.pop %v382
      %v384 = vmul.f32 %v269, 1.442695
      %v385 = vpow.pop %v384
      %v386 = vmul.f32 %v270, 1.442695
      %v387 = vpow.pop %v386
      %v388 = vmul.f32 %v271, 1.442695
      %v389 = vpow.pop %v388
      %v390 = vmul.f32 %v272, 1.442695
      %v391 = vpow.pop %v390
      %v392 = vmul.f32 %v273, 1.442695
      %v393 = vpow.pop %v392
      %v394 = vmul.f32 %v274, 1.442695
      %v395 = vpow.pop %v394
      %v396 = vmul.f32 %v275, 1.442695
      %v397 = vpow.pop %v396
      %v398 = vmul.f32 %v276, 1.442695
      %v399 = vpow.pop %v398
      %v400 = vmul.f32 %v277, 1.442695
      %v401 = vpow.pop %v400
      %v402 = vmul.f32 %v278, 1.442695
      %v403 = vpow.pop %v402
      %v404 = vmul.f32 %v279, 1.442695
      %v405 = vpow.pop %v404
      %v406 = vmul.f32 %v280, 1.442695
      %v407 = vpow.pop %v406
      %v408 = vmul.f32 %v281, 1.442695
      %v409 = vpow.pop %v408
      %v410 = vmul.f32 %v282, 1.442695
      %v411 = vpow.pop %v410
      %v412 = vmul.f32 %v283, 1.442695
      %v413 = vpow.pop %v412
      %v414 = vmul.f32 %v284, 1.442695
      %v415 = vpow.pop %v414
      %v416 = vmul.f32 %v285, 1.442695
      %v417 = vpow.pop %v416
      %v418 = vadd.f32 %v287, 1.0
      %v419 = vadd.f32 %v289, 1.0
      %v420 = vadd.f32 %v291, 1.0
      %v421 = vadd.f32 %v293, 1.0
      %v422 = vadd.f32 %v295, 1.0
      %v423 = vadd.f32 %v297, 1.0
      %v424 = vadd.f32 %v299, 1.0
      %v425 = vadd.f32 %v301, 1.0
      %v426 = vadd.f32 %v303, 1.0
      %v427 = vadd.f32 %v305, 1.0
      %v428 = vadd.f32 %v307, 1.0
      %v429 = vadd.f32 %v309, 1.0
      %v430 = vadd.f32 %v311, 1.0
      %v431 = vadd.f32 %v313, 1.0
      %v432 = vadd.f32 %v315, 1.0
      %v433 = vadd.f32 %v317, 1.0
      %v434 = vadd.f32 %v319, 1.0
      %v435 = vadd.f32 %v321, 1.0
      %v436 = vadd.f32 %v323, 1.0
      %v437 = vadd.f32 %v325, 1.0
      %v438 = vadd.f32 %v327, 1.0
      %v439 = vadd.f32 %v329, 1.0
      %v440 = vadd.f32 %v331, 1.0
      %v441 = vadd.f32 %v333, 1.0
      %v442 = vadd.f32 %v335, 1.0
      %v443 = vadd.f32 %v337, 1.0
      %v444 = vadd.f32 %v339, 1.0
      %v445 = vadd.f32 %v341, 1.0
      %v446 = vadd.f32 %v343, 1.0
      %v447 = vadd.f32 %v345, 1.0
      %v448 = vadd.f32 %v347, 1.0
      %v449 = vadd.f32 %v349, 1.0
      %v450 = vadd.f32 %v351, 1.0
      %v451 = vadd.f32 %v353, 1.0
      %v452 = vadd.f32 %v355, 1.0
      %v453 = vadd.f32 %v357, 1.0
      %v454 = vadd.f32 %v359, 1.0
      %v455 = vadd.f32 %v361, 1.0
      %v456 = vadd.f32 %v363, 1.0
      %v457 = vadd.f32 %v365, 1.0
      %v458 = vadd.f32 %v367, 1.0
      %v459 = vadd.f32 %v369, 1.0
      %v460 = vadd.f32 %v371, 1.0
      %v461 = vadd.f32 %v373, 1.0
      %v462 = vadd.f32 %v375, 1.0
      %v463 = vadd.f32 %v377, 1.0
      %v464 = vadd.f32 %v379, 1.0
      %v465 = vadd.f32 %v381, 1.0
      %v466 = vadd.f32 %v383, 1.0
      %v467 = vadd.f32 %v385, 1.0
      %v468 = vadd.f32 %v387, 1.0
      %v469 = vadd.f32 %v389, 1.0
      %v470 = vadd.f32 %v391, 1.0
      %v471 = vadd.f32 %v393, 1.0
      %v472 = vadd.f32 %v395, 1.0
      %v473 = vadd.f32 %v397, 1.0
      %v474 = vadd.f32 %v399, 1.0
      %v475 = vadd.f32 %v401, 1.0
      %v476 = vadd.f32 %v403, 1.0
      %v477 = vadd.f32 %v405, 1.0
      %v478 = vadd.f32 %v407, 1.0
      %v479 = vadd.f32 %v409, 1.0
      %v480 = vadd.f32 %v411, 1.0
      %v481 = vadd.f32 %v413, 1.0
      %v482 = vadd.f32 %v415, 1.0
      %v483 = vadd.f32 %v417, 1.0
      %v484 = vrcp.pop %v418
      %v485 = vmul.f32 %v418, %v484
      %v486 = vsub.f32 1.0, %v485
      %v487 = vmul.f32 %v484, %v486
      %v488 = vadd.f32 %v484, %v487
      %vm489 = vweird.f32 %v418
      %vm490 = vweird.f32 %v484
      %vm491 = vmor %vm489, %vm490
      %v492 = vsel %vm491, %v484, %v488
      %v493 = vand.u32 2147483647, %v418
      %vm494 = vcmp.eq.f32.partialorder %v493, 8.507059e+37
      %v495 = vand.u32 %v418, 2147483648
      %v496 = vor.u32 1.1754944e-38, %v495
      %v497 = vsel %vm494, %v496, %v492
      %v498 = vmul.f32 1.0, %v497
      %v499 = vrcp.pop %v419
      %v500 = vmul.f32 %v419, %v499
      %v501 = vsub.f32 1.0, %v500
      %v502 = vmul.f32 %v499, %v501
      %v503 = vadd.f32 %v499, %v502
      %vm504 = vweird.f32 %v419
      %vm505 = vweird.f32 %v499
      %vm506 = vmor %vm504, %vm505
      %v507 = vsel %vm506, %v499, %v503
      %v508 = vand.u32 2147483647, %v419
      %vm509 = vcmp.eq.f32.partialorder %v508, 8.507059e+37
      %v510 = vand.u32 %v419, 2147483648
      %v511 = vor.u32 1.1754944e-38, %v510
      %v512 = vsel %vm509, %v511, %v507
      %v513 = vmul.f32 1.0, %v512
      %v514 = vrcp.pop %v420
      %v515 = vmul.f32 %v420, %v514
      %v516 = vsub.f32 1.0, %v515
      %v517 = vmul.f32 %v514, %v516
      %v518 = vadd.f32 %v514, %v517
      %vm519 = vweird.f32 %v420
      %vm520 = vweird.f32 %v514
      %vm521 = vmor %vm519, %vm520
      %v522 = vsel %vm521, %v514, %v518
      %v523 = vand.u32 2147483647, %v420
      %vm524 = vcmp.eq.f32.partialorder %v523, 8.507059e+37
      %v525 = vand.u32 %v420, 2147483648
      %v526 = vor.u32 1.1754944e-38, %v525
      %v527 = vsel %vm524, %v526, %v522
      %v528 = vmul.f32 1.0, %v527
      %v529 = vrcp.pop %v421
      %v530 = vmul.f32 %v421, %v529
      %v531 = vsub.f32 1.0, %v530
      %v532 = vmul.f32 %v529, %v531
      %v533 = vadd.f32 %v529, %v532
      %vm534 = vweird.f32 %v421
      %vm535 = vweird.f32 %v529
      %vm536 = vmor %vm534, %vm535
      %v537 = vsel %vm536, %v529, %v533
      %v538 = vand.u32 2147483647, %v421
      %vm539 = vcmp.eq.f32.partialorder %v538, 8.507059e+37
      %v540 = vand.u32 %v421, 2147483648
      %v541 = vor.u32 1.1754944e-38, %v540
      %v542 = vsel %vm539, %v541, %v537
      %v543 = vmul.f32 1.0, %v542
      %v544 = vrcp.pop %v422
      %v545 = vmul.f32 %v422, %v544
      %v546 = vsub.f32 1.0, %v545
      %v547 = vmul.f32 %v544, %v546
      %v548 = vadd.f32 %v544, %v547
      %vm549 = vweird.f32 %v422
      %vm550 = vweird.f32 %v544
      %vm551 = vmor %vm549, %vm550
      %v552 = vsel %vm551, %v544, %v548
      %v553 = vand.u32 2147483647, %v422
      %vm554 = vcmp.eq.f32.partialorder %v553, 8.507059e+37
      %v555 = vand.u32 %v422, 2147483648
      %v556 = vor.u32 1.1754944e-38, %v555
      %v557 = vsel %vm554, %v556, %v552
      %v558 = vmul.f32 1.0, %v557
      %v559 = vrcp.pop %v423
      %v560 = vmul.f32 %v423, %v559
      %v561 = vsub.f32 1.0, %v560
      %v562 = vmul.f32 %v559, %v561
      %v563 = vadd.f32 %v559, %v562
      %vm564 = vweird.f32 %v423
      %vm565 = vweird.f32 %v559
      %vm566 = vmor %vm564, %vm565
      %v567 = vsel %vm566, %v559, %v563
      %v568 = vand.u32 2147483647, %v423
      %vm569 = vcmp.eq.f32.partialorder %v568, 8.507059e+37
      %v570 = vand.u32 %v423, 2147483648
      %v571 = vor.u32 1.1754944e-38, %v570
      %v572 = vsel %vm569, %v571, %v567
      %v573 = vmul.f32 1.0, %v572
      %v574 = vrcp.pop %v424
      %v575 = vmul.f32 %v424, %v574
      %v576 = vsub.f32 1.0, %v575
      %v577 = vmul.f32 %v574, %v576
      %v578 = vadd.f32 %v574, %v577
      %vm579 = vweird.f32 %v424
      %vm580 = vweird.f32 %v574
      %vm581 = vmor %vm579, %vm580
      %v582 = vsel %vm581, %v574, %v578
      %v583 = vand.u32 2147483647, %v424
      %vm584 = vcmp.eq.f32.partialorder %v583, 8.507059e+37
      %v585 = vand.u32 %v424, 2147483648
      %v586 = vor.u32 1.1754944e-38, %v585
      %v587 = vsel %vm584, %v586, %v582
      %v588 = vmul.f32 1.0, %v587
      %v589 = vrcp.pop %v425
      %v590 = vmul.f32 %v425, %v589
      %v591 = vsub.f32 1.0, %v590
      %v592 = vmul.f32 %v589, %v591
      %v593 = vadd.f32 %v589, %v592
      %vm594 = vweird.f32 %v425
      %vm595 = vweird.f32 %v589
      %vm596 = vmor %vm594, %vm595
      %v597 = vsel %vm596, %v589, %v593
      %v598 = vand.u32 2147483647, %v425
      %vm599 = vcmp.eq.f32.partialorder %v598, 8.507059e+37
      %v600 = vand.u32 %v425, 2147483648
      %v601 = vor.u32 1.1754944e-38, %v600
      %v602 = vsel %vm599, %v601, %v597
      %v603 = vmul.f32 1.0, %v602
      %v604 = vrcp.pop %v426
      %v605 = vmul.f32 %v426, %v604
      %v606 = vsub.f32 1.0, %v605
      %v607 = vmul.f32 %v604, %v606
      %v608 = vadd.f32 %v604, %v607
      %vm609 = vweird.f32 %v426
      %vm610 = vweird.f32 %v604
      %vm611 = vmor %vm609, %vm610
      %v612 = vsel %vm611, %v604, %v608
      %v613 = vand.u32 2147483647, %v426
      %vm614 = vcmp.eq.f32.partialorder %v613, 8.507059e+37
      %v615 = vand.u32 %v426, 2147483648
      %v616 = vor.u32 1.1754944e-38, %v615
      %v617 = vsel %vm614, %v616, %v612
      %v618 = vmul.f32 1.0, %v617
      %v619 = vrcp.pop %v427
      %v620 = vmul.f32 %v427, %v619
      %v621 = vsub.f32 1.0, %v620
      %v622 = vmul.f32 %v619, %v621
      %v623 = vadd.f32 %v619, %v622
      %vm624 = vweird.f32 %v427
      %vm625 = vweird.f32 %v619
      %vm626 = vmor %vm624, %vm625
      %v627 = vsel %vm626, %v619, %v623
      %v628 = vand.u32 2147483647, %v427
      %vm629 = vcmp.eq.f32.partialorder %v628, 8.507059e+37
      %v630 = vand.u32 %v427, 2147483648
      %v631 = vor.u32 1.1754944e-38, %v630
      %v632 = vsel %vm629, %v631, %v627
      %v633 = vmul.f32 1.0, %v632
      %v634 = vrcp.pop %v428
      %v635 = vmul.f32 %v428, %v634
      %v636 = vsub.f32 1.0, %v635
      %v637 = vmul.f32 %v634, %v636
      %v638 = vadd.f32 %v634, %v637
      %vm639 = vweird.f32 %v428
      %vm640 = vweird.f32 %v634
      %vm641 = vmor %vm639, %vm640
      %v642 = vsel %vm641, %v634, %v638
      %v643 = vand.u32 2147483647, %v428
      %vm644 = vcmp.eq.f32.partialorder %v643, 8.507059e+37
      %v645 = vand.u32 %v428, 2147483648
      %v646 = vor.u32 1.1754944e-38, %v645
      %v647 = vsel %vm644, %v646, %v642
      %v648 = vmul.f32 1.0, %v647
      %v649 = vrcp.pop %v429
      %v650 = vmul.f32 %v429, %v649
      %v651 = vsub.f32 1.0, %v650
      %v652 = vmul.f32 %v649, %v651
      %v653 = vadd.f32 %v649, %v652
      %vm654 = vweird.f32 %v429
      %vm655 = vweird.f32 %v649
      %vm656 = vmor %vm654, %vm655
      %v657 = vsel %vm656, %v649, %v653
      %v658 = vand.u32 2147483647, %v429
      %vm659 = vcmp.eq.f32.partialorder %v658, 8.507059e+37
      %v660 = vand.u32 %v429, 2147483648
      %v661 = vor.u32 1.1754944e-38, %v660
      %v662 = vsel %vm659, %v661, %v657
      %v663 = vmul.f32 1.0, %v662
      %v664 = vrcp.pop %v430
      %v665 = vmul.f32 %v430, %v664
      %v666 = vsub.f32 1.0, %v665
      %v667 = vmul.f32 %v664, %v666
      %v668 = vadd.f32 %v664, %v667
      %vm669 = vweird.f32 %v430
      %vm670 = vweird.f32 %v664
      %vm671 = vmor %vm669, %vm670
      %v672 = vsel %vm671, %v664, %v668
      %v673 = vand.u32 2147483647, %v430
      %vm674 = vcmp.eq.f32.partialorder %v673, 8.507059e+37
      %v675 = vand.u32 %v430, 2147483648
      %v676 = vor.u32 1.1754944e-38, %v675
      %v677 = vsel %vm674, %v676, %v672
      %v678 = vmul.f32 1.0, %v677
      %v679 = vrcp.pop %v431
      %v680 = vmul.f32 %v431, %v679
      %v681 = vsub.f32 1.0, %v680
      %v682 = vmul.f32 %v679, %v681
      %v683 = vadd.f32 %v679, %v682
      %vm684 = vweird.f32 %v431
      %vm685 = vweird.f32 %v679
      %vm686 = vmor %vm684, %vm685
      %v687 = vsel %vm686, %v679, %v683
      %v688 = vand.u32 2147483647, %v431
      %vm689 = vcmp.eq.f32.partialorder %v688, 8.507059e+37
      %v690 = vand.u32 %v431, 2147483648
      %v691 = vor.u32 1.1754944e-38, %v690
      %v692 = vsel %vm689, %v691, %v687
      %v693 = vmul.f32 1.0, %v692
      %v694 = vrcp.pop %v432
      %v695 = vmul.f32 %v432, %v694
      %v696 = vsub.f32 1.0, %v695
      %v697 = vmul.f32 %v694, %v696
      %v698 = vadd.f32 %v694, %v697
      %vm699 = vweird.f32 %v432
      %vm700 = vweird.f32 %v694
      %vm701 = vmor %vm699, %vm700
      %v702 = vsel %vm701, %v694, %v698
      %v703 = vand.u32 2147483647, %v432
      %vm704 = vcmp.eq.f32.partialorder %v703, 8.507059e+37
      %v705 = vand.u32 %v432, 2147483648
      %v706 = vor.u32 1.1754944e-38, %v705
      %v707 = vsel %vm704, %v706, %v702
      %v708 = vmul.f32 1.0, %v707
      %v709 = vrcp.pop %v433
      %v710 = vmul.f32 %v433, %v709
      %v711 = vsub.f32 1.0, %v710
      %v712 = vmul.f32 %v709, %v711
      %v713 = vadd.f32 %v709, %v712
      %vm714 = vweird.f32 %v433
      %vm715 = vweird.f32 %v709
      %vm716 = vmor %vm714, %vm715
      %v717 = vsel %vm716, %v709, %v713
      %v718 = vand.u32 2147483647, %v433
      %vm719 = vcmp.eq.f32.partialorder %v718, 8.507059e+37
      %v720 = vand.u32 %v433, 2147483648
      %v721 = vor.u32 1.1754944e-38, %v720
      %v722 = vsel %vm719, %v721, %v717
      %v723 = vmul.f32 1.0, %v722
      %v724 = vrcp.pop %v434
      %v725 = vmul.f32 %v434, %v724
      %v726 = vsub.f32 1.0, %v725
      %v727 = vmul.f32 %v724, %v726
      %v728 = vadd.f32 %v724, %v727
      %vm729 = vweird.f32 %v434
      %vm730 = vweird.f32 %v724
      %vm731 = vmor %vm729, %vm730
      %v732 = vsel %vm731, %v724, %v728
      %v733 = vand.u32 2147483647, %v434
      %vm734 = vcmp.eq.f32.partialorder %v733, 8.507059e+37
      %v735 = vand.u32 %v434, 2147483648
      %v736 = vor.u32 1.1754944e-38, %v735
      %v737 = vsel %vm734, %v736, %v732
      %v738 = vmul.f32 1.0, %v737
      %v739 = vrcp.pop %v435
      %v740 = vmul.f32 %v435, %v739
      %v741 = vsub.f32 1.0, %v740
      %v742 = vmul.f32 %v739, %v741
      %v743 = vadd.f32 %v739, %v742
      %vm744 = vweird.f32 %v435
      %vm745 = vweird.f32 %v739
      %vm746 = vmor %vm744, %vm745
      %v747 = vsel %vm746, %v739, %v743
      %v748 = vand.u32 2147483647, %v435
      %vm749 = vcmp.eq.f32.partialorder %v748, 8.507059e+37
      %v750 = vand.u32 %v435, 2147483648
      %v751 = vor.u32 1.1754944e-38, %v750
      %v752 = vsel %vm749, %v751, %v747
      %v753 = vmul.f32 1.0, %v752
      %v754 = vrcp.pop %v436
      %v755 = vmul.f32 %v436, %v754
      %v756 = vsub.f32 1.0, %v755
      %v757 = vmul.f32 %v754, %v756
      %v758 = vadd.f32 %v754, %v757
      %vm759 = vweird.f32 %v436
      %vm760 = vweird.f32 %v754
      %vm761 = vmor %vm759, %vm760
      %v762 = vsel %vm761, %v754, %v758
      %v763 = vand.u32 2147483647, %v436
      %vm764 = vcmp.eq.f32.partialorder %v763, 8.507059e+37
      %v765 = vand.u32 %v436, 2147483648
      %v766 = vor.u32 1.1754944e-38, %v765
      %v767 = vsel %vm764, %v766, %v762
      %v768 = vmul.f32 1.0, %v767
      %v769 = vrcp.pop %v437
      %v770 = vmul.f32 %v437, %v769
      %v771 = vsub.f32 1.0, %v770
      %v772 = vmul.f32 %v769, %v771
      %v773 = vadd.f32 %v769, %v772
      %vm774 = vweird.f32 %v437
      %vm775 = vweird.f32 %v769
      %vm776 = vmor %vm774, %vm775
      %v777 = vsel %vm776, %v769, %v773
      %v778 = vand.u32 2147483647, %v437
      %vm779 = vcmp.eq.f32.partialorder %v778, 8.507059e+37
      %v780 = vand.u32 %v437, 2147483648
      %v781 = vor.u32 1.1754944e-38, %v780
      %v782 = vsel %vm779, %v781, %v777
      %v783 = vmul.f32 1.0, %v782
      %v784 = vrcp.pop %v438
      %v785 = vmul.f32 %v438, %v784
      %v786 = vsub.f32 1.0, %v785
      %v787 = vmul.f32 %v784, %v786
      %v788 = vadd.f32 %v784, %v787
      %vm789 = vweird.f32 %v438
      %vm790 = vweird.f32 %v784
      %vm791 = vmor %vm789, %vm790
      %v792 = vsel %vm791, %v784, %v788
      %v793 = vand.u32 2147483647, %v438
      %vm794 = vcmp.eq.f32.partialorder %v793, 8.507059e+37
      %v795 = vand.u32 %v438, 2147483648
      %v796 = vor.u32 1.1754944e-38, %v795
      %v797 = vsel %vm794, %v796, %v792
      %v798 = vmul.f32 1.0, %v797
      %v799 = vrcp.pop %v439
      %v800 = vmul.f32 %v439, %v799
      %v801 = vsub.f32 1.0, %v800
      %v802 = vmul.f32 %v799, %v801
      %v803 = vadd.f32 %v799, %v802
      %vm804 = vweird.f32 %v439
      %vm805 = vweird.f32 %v799
      %vm806 = vmor %vm804, %vm805
      %v807 = vsel %vm806, %v799, %v803
      %v808 = vand.u32 2147483647, %v439
      %vm809 = vcmp.eq.f32.partialorder %v808, 8.507059e+37
      %v810 = vand.u32 %v439, 2147483648
      %v811 = vor.u32 1.1754944e-38, %v810
      %v812 = vsel %vm809, %v811, %v807
      %v813 = vmul.f32 1.0, %v812
      %v814 = vrcp.pop %v440
      %v815 = vmul.f32 %v440, %v814
      %v816 = vsub.f32 1.0, %v815
      %v817 = vmul.f32 %v814, %v816
      %v818 = vadd.f32 %v814, %v817
      %vm819 = vweird.f32 %v440
      %vm820 = vweird.f32 %v814
      %vm821 = vmor %vm819, %vm820
      %v822 = vsel %vm821, %v814, %v818
      %v823 = vand.u32 2147483647, %v440
      %vm824 = vcmp.eq.f32.partialorder %v823, 8.507059e+37
      %v825 = vand.u32 %v440, 2147483648
      %v826 = vor.u32 1.1754944e-38, %v825
      %v827 = vsel %vm824, %v826, %v822
      %v828 = vmul.f32 1.0, %v827
      %v829 = vrcp.pop %v441
      %v830 = vmul.f32 %v441, %v829
      %v831 = vsub.f32 1.0, %v830
      %v832 = vmul.f32 %v829, %v831
      %v833 = vadd.f32 %v829, %v832
      %vm834 = vweird.f32 %v441
      %vm835 = vweird.f32 %v829
      %vm836 = vmor %vm834, %vm835
      %v837 = vsel %vm836, %v829, %v833
      %v838 = vand.u32 2147483647, %v441
      %vm839 = vcmp.eq.f32.partialorder %v838, 8.507059e+37
      %v840 = vand.u32 %v441, 2147483648
      %v841 = vor.u32 1.1754944e-38, %v840
      %v842 = vsel %vm839, %v841, %v837
      %v843 = vmul.f32 1.0, %v842
      %v844 = vrcp.pop %v442
      %v845 = vmul.f32 %v442, %v844
      %v846 = vsub.f32 1.0, %v845
      %v847 = vmul.f32 %v844, %v846
      %v848 = vadd.f32 %v844, %v847
      %vm849 = vweird.f32 %v442
      %vm850 = vweird.f32 %v844
      %vm851 = vmor %vm849, %vm850
      %v852 = vsel %vm851, %v844, %v848
      %v853 = vand.u32 2147483647, %v442
      %vm854 = vcmp.eq.f32.partialorder %v853, 8.507059e+37
      %v855 = vand.u32 %v442, 2147483648
      %v856 = vor.u32 1.1754944e-38, %v855
      %v857 = vsel %vm854, %v856, %v852
      %v858 = vmul.f32 1.0, %v857
      %v859 = vrcp.pop %v443
      %v860 = vmul.f32 %v443, %v859
      %v861 = vsub.f32 1.0, %v860
      %v862 = vmul.f32 %v859, %v861
      %v863 = vadd.f32 %v859, %v862
      %vm864 = vweird.f32 %v443
      %vm865 = vweird.f32 %v859
      %vm866 = vmor %vm864, %vm865
      %v867 = vsel %vm866, %v859, %v863
      %v868 = vand.u32 2147483647, %v443
      %vm869 = vcmp.eq.f32.partialorder %v868, 8.507059e+37
      %v870 = vand.u32 %v443, 2147483648
      %v871 = vor.u32 1.1754944e-38, %v870
      %v872 = vsel %vm869, %v871, %v867
      %v873 = vmul.f32 1.0, %v872
      %v874 = vrcp.pop %v444
      %v875 = vmul.f32 %v444, %v874
      %v876 = vsub.f32 1.0, %v875
      %v877 = vmul.f32 %v874, %v876
      %v878 = vadd.f32 %v874, %v877
      %vm879 = vweird.f32 %v444
      %vm880 = vweird.f32 %v874
      %vm881 = vmor %vm879, %vm880
      %v882 = vsel %vm881, %v874, %v878
      %v883 = vand.u32 2147483647, %v444
      %vm884 = vcmp.eq.f32.partialorder %v883, 8.507059e+37
      %v885 = vand.u32 %v444, 2147483648
      %v886 = vor.u32 1.1754944e-38, %v885
      %v887 = vsel %vm884, %v886, %v882
      %v888 = vmul.f32 1.0, %v887
      %v889 = vrcp.pop %v445
      %v890 = vmul.f32 %v445, %v889
      %v891 = vsub.f32 1.0, %v890
      %v892 = vmul.f32 %v889, %v891
      %v893 = vadd.f32 %v889, %v892
      %vm894 = vweird.f32 %v445
      %vm895 = vweird.f32 %v889
      %vm896 = vmor %vm894, %vm895
      %v897 = vsel %vm896, %v889, %v893
      %v898 = vand.u32 2147483647, %v445
      %vm899 = vcmp.eq.f32.partialorder %v898, 8.507059e+37
      %v900 = vand.u32 %v445, 2147483648
      %v901 = vor.u32 1.1754944e-38, %v900
      %v902 = vsel %vm899, %v901, %v897
      %v903 = vmul.f32 1.0, %v902
      %v904 = vrcp.pop %v446
      %v905 = vmul.f32 %v446, %v904
      %v906 = vsub.f32 1.0, %v905
      %v907 = vmul.f32 %v904, %v906
      %v908 = vadd.f32 %v904, %v907
      %vm909 = vweird.f32 %v446
      %vm910 = vweird.f32 %v904
      %vm911 = vmor %vm909, %vm910
      %v912 = vsel %vm911, %v904, %v908
      %v913 = vand.u32 2147483647, %v446
      %vm914 = vcmp.eq.f32.partialorder %v913, 8.507059e+37
      %v915 = vand.u32 %v446, 2147483648
      %v916 = vor.u32 1.1754944e-38, %v915
      %v917 = vsel %vm914, %v916, %v912
      %v918 = vmul.f32 1.0, %v917
      %v919 = vrcp.pop %v447
      %v920 = vmul.f32 %v447, %v919
      %v921 = vsub.f32 1.0, %v920
      %v922 = vmul.f32 %v919, %v921
      %v923 = vadd.f32 %v919, %v922
      %vm924 = vweird.f32 %v447
      %vm925 = vweird.f32 %v919
      %vm926 = vmor %vm924, %vm925
      %v927 = vsel %vm926, %v919, %v923
      %v928 = vand.u32 2147483647, %v447
      %vm929 = vcmp.eq.f32.partialorder %v928, 8.507059e+37
      %v930 = vand.u32 %v447, 2147483648
      %v931 = vor.u32 1.1754944e-38, %v930
      %v932 = vsel %vm929, %v931, %v927
      %v933 = vmul.f32 1.0, %v932
      %v934 = vrcp.pop %v448
      %v935 = vmul.f32 %v448, %v934
      %v936 = vsub.f32 1.0, %v935
      %v937 = vmul.f32 %v934, %v936
      %v938 = vadd.f32 %v934, %v937
      %vm939 = vweird.f32 %v448
      %vm940 = vweird.f32 %v934
      %vm941 = vmor %vm939, %vm940
      %v942 = vsel %vm941, %v934, %v938
      %v943 = vand.u32 2147483647, %v448
      %vm944 = vcmp.eq.f32.partialorder %v943, 8.507059e+37
      %v945 = vand.u32 %v448, 2147483648
      %v946 = vor.u32 1.1754944e-38, %v945
      %v947 = vsel %vm944, %v946, %v942
      %v948 = vmul.f32 1.0, %v947
      %v949 = vrcp.pop %v449
      %v950 = vmul.f32 %v449, %v949
      %v951 = vsub.f32 1.0, %v950
      %v952 = vmul.f32 %v949, %v951
      %v953 = vadd.f32 %v949, %v952
      %vm954 = vweird.f32 %v449
      %vm955 = vweird.f32 %v949
      %vm956 = vmor %vm954, %vm955
      %v957 = vsel %vm956, %v949, %v953
      %v958 = vand.u32 2147483647, %v449
      %vm959 = vcmp.eq.f32.partialorder %v958, 8.507059e+37
      %v960 = vand.u32 %v449, 2147483648
      %v961 = vor.u32 1.1754944e-38, %v960
      %v962 = vsel %vm959, %v961, %v957
      %v963 = vmul.f32 1.0, %v962
      %v964 = vrcp.pop %v450
      %v965 = vmul.f32 %v450, %v964
      %v966 = vsub.f32 1.0, %v965
      %v967 = vmul.f32 %v964, %v966
      %v968 = vadd.f32 %v964, %v967
      %vm969 = vweird.f32 %v450
      %vm970 = vweird.f32 %v964
      %vm971 = vmor %vm969, %vm970
      %v972 = vsel %vm971, %v964, %v968
      %v973 = vand.u32 2147483647, %v450
      %vm974 = vcmp.eq.f32.partialorder %v973, 8.507059e+37
      %v975 = vand.u32 %v450, 2147483648
      %v976 = vor.u32 1.1754944e-38, %v975
      %v977 = vsel %vm974, %v976, %v972
      %v978 = vmul.f32 1.0, %v977
      %v979 = vrcp.pop %v451
      %v980 = vmul.f32 %v451, %v979
      %v981 = vsub.f32 1.0, %v980
      %v982 = vmul.f32 %v979, %v981
      %v983 = vadd.f32 %v979, %v982
      %vm984 = vweird.f32 %v451
      %vm985 = vweird.f32 %v979
      %vm986 = vmor %vm984, %vm985
      %v987 = vsel %vm986, %v979, %v983
      %v988 = vand.u32 2147483647, %v451
      %vm989 = vcmp.eq.f32.partialorder %v988, 8.507059e+37
      %v990 = vand.u32 %v451, 2147483648
      %v991 = vor.u32 1.1754944e-38, %v990
      %v992 = vsel %vm989, %v991, %v987
      %v993 = vmul.f32 1.0, %v992
      %v994 = vrcp.pop %v452
      %v995 = vmul.f32 %v452, %v994
      %v996 = vsub.f32 1.0, %v995
      %v997 = vmul.f32 %v994, %v996
      %v998 = vadd.f32 %v994, %v997
      %vm999 = vweird.f32 %v452
      %vm1000 = vweird.f32 %v994
      %vm1001 = vmor %vm999, %vm1000
      %v1002 = vsel %vm1001, %v994, %v998
      %v1003 = vand.u32 2147483647, %v452
      %vm1004 = vcmp.eq.f32.partialorder %v1003, 8.507059e+37
      %v1005 = vand.u32 %v452, 2147483648
      %v1006 = vor.u32 1.1754944e-38, %v1005
      %v1007 = vsel %vm1004, %v1006, %v1002
      %v1008 = vmul.f32 1.0, %v1007
      %v1009 = vrcp.pop %v453
      %v1010 = vmul.f32 %v453, %v1009
      %v1011 = vsub.f32 1.0, %v1010
      %v1012 = vmul.f32 %v1009, %v1011
      %v1013 = vadd.f32 %v1009, %v1012
      %vm1014 = vweird.f32 %v453
      %vm1015 = vweird.f32 %v1009
      %vm1016 = vmor %vm1014, %vm1015
      %v1017 = vsel %vm1016, %v1009, %v1013
      %v1018 = vand.u32 2147483647, %v453
      %vm1019 = vcmp.eq.f32.partialorder %v1018, 8.507059e+37
      %v1020 = vand.u32 %v453, 2147483648
      %v1021 = vor.u32 1.1754944e-38, %v1020
      %v1022 = vsel %vm1019, %v1021, %v1017
      %v1023 = vmul.f32 1.0, %v1022
      %v1024 = vrcp.pop %v454
      %v1025 = vmul.f32 %v454, %v1024
      %v1026 = vsub.f32 1.0, %v1025
      %v1027 = vmul.f32 %v1024, %v1026
      %v1028 = vadd.f32 %v1024, %v1027
      %vm1029 = vweird.f32 %v454
      %vm1030 = vweird.f32 %v1024
      %vm1031 = vmor %vm1029, %vm1030
      %v1032 = vsel %vm1031, %v1024, %v1028
      %v1033 = vand.u32 2147483647, %v454
      %vm1034 = vcmp.eq.f32.partialorder %v1033, 8.507059e+37
      %v1035 = vand.u32 %v454, 2147483648
      %v1036 = vor.u32 1.1754944e-38, %v1035
      %v1037 = vsel %vm1034, %v1036, %v1032
      %v1038 = vmul.f32 1.0, %v1037
      %v1039 = vrcp.pop %v455
      %v1040 = vmul.f32 %v455, %v1039
      %v1041 = vsub.f32 1.0, %v1040
      %v1042 = vmul.f32 %v1039, %v1041
      %v1043 = vadd.f32 %v1039, %v1042
      %vm1044 = vweird.f32 %v455
      %vm1045 = vweird.f32 %v1039
      %vm1046 = vmor %vm1044, %vm1045
      %v1047 = vsel %vm1046, %v1039, %v1043
      %v1048 = vand.u32 2147483647, %v455
      %vm1049 = vcmp.eq.f32.partialorder %v1048, 8.507059e+37
      %v1050 = vand.u32 %v455, 2147483648
      %v1051 = vor.u32 1.1754944e-38, %v1050
      %v1052 = vsel %vm1049, %v1051, %v1047
      %v1053 = vmul.f32 1.0, %v1052
      %v1054 = vrcp.pop %v456
      %v1055 = vmul.f32 %v456, %v1054
      %v1056 = vsub.f32 1.0, %v1055
      %v1057 = vmul.f32 %v1054, %v1056
      %v1058 = vadd.f32 %v1054, %v1057
      %vm1059 = vweird.f32 %v456
      %vm1060 = vweird.f32 %v1054
      %vm1061 = vmor %vm1059, %vm1060
      %v1062 = vsel %vm1061, %v1054, %v1058
      %v1063 = vand.u32 2147483647, %v456
      %vm1064 = vcmp.eq.f32.partialorder %v1063, 8.507059e+37
      %v1065 = vand.u32 %v456, 2147483648
      %v1066 = vor.u32 1.1754944e-38, %v1065
      %v1067 = vsel %vm1064, %v1066, %v1062
      %v1068 = vmul.f32 1.0, %v1067
      %v1069 = vrcp.pop %v457
      %v1070 = vmul.f32 %v457, %v1069
      %v1071 = vsub.f32 1.0, %v1070
      %v1072 = vmul.f32 %v1069, %v1071
      %v1073 = vadd.f32 %v1069, %v1072
      %vm1074 = vweird.f32 %v457
      %vm1075 = vweird.f32 %v1069
      %vm1076 = vmor %vm1074, %vm1075
      %v1077 = vsel %vm1076, %v1069, %v1073
      %v1078 = vand.u32 2147483647, %v457
      %vm1079 = vcmp.eq.f32.partialorder %v1078, 8.507059e+37
      %v1080 = vand.u32 %v457, 2147483648
      %v1081 = vor.u32 1.1754944e-38, %v1080
      %v1082 = vsel %vm1079, %v1081, %v1077
      %v1083 = vmul.f32 1.0, %v1082
      %v1084 = vrcp.pop %v458
      %v1085 = vmul.f32 %v458, %v1084
      %v1086 = vsub.f32 1.0, %v1085
      %v1087 = vmul.f32 %v1084, %v1086
      %v1088 = vadd.f32 %v1084, %v1087
      %vm1089 = vweird.f32 %v458
      %vm1090 = vweird.f32 %v1084
      %vm1091 = vmor %vm1089, %vm1090
      %v1092 = vsel %vm1091, %v1084, %v1088
      %v1093 = vand.u32 2147483647, %v458
      %vm1094 = vcmp.eq.f32.partialorder %v1093, 8.507059e+37
      %v1095 = vand.u32 %v458, 2147483648
      %v1096 = vor.u32 1.1754944e-38, %v1095
      %v1097 = vsel %vm1094, %v1096, %v1092
      %v1098 = vmul.f32 1.0, %v1097
      %v1099 = vrcp.pop %v459
      %v1100 = vmul.f32 %v459, %v1099
      %v1101 = vsub.f32 1.0, %v1100
      %v1102 = vmul.f32 %v1099, %v1101
      %v1103 = vadd.f32 %v1099, %v1102
      %vm1104 = vweird.f32 %v459
      %vm1105 = vweird.f32 %v1099
      %vm1106 = vmor %vm1104, %vm1105
      %v1107 = vsel %vm1106, %v1099, %v1103
      %v1108 = vand.u32 2147483647, %v459
      %vm1109 = vcmp.eq.f32.partialorder %v1108, 8.507059e+37
      %v1110 = vand.u32 %v459, 2147483648
      %v1111 = vor.u32 1.1754944e-38, %v1110
      %v1112 = vsel %vm1109, %v1111, %v1107
      %v1113 = vmul.f32 1.0, %v1112
      %v1114 = vrcp.pop %v460
      %v1115 = vmul.f32 %v460, %v1114
      %v1116 = vsub.f32 1.0, %v1115
      %v1117 = vmul.f32 %v1114, %v1116
      %v1118 = vadd.f32 %v1114, %v1117
      %vm1119 = vweird.f32 %v460
      %vm1120 = vweird.f32 %v1114
      %vm1121 = vmor %vm1119, %vm1120
      %v1122 = vsel %vm1121, %v1114, %v1118
      %v1123 = vand.u32 2147483647, %v460
      %vm1124 = vcmp.eq.f32.partialorder %v1123, 8.507059e+37
      %v1125 = vand.u32 %v460, 2147483648
      %v1126 = vor.u32 1.1754944e-38, %v1125
      %v1127 = vsel %vm1124, %v1126, %v1122
      %v1128 = vmul.f32 1.0, %v1127
      %v1129 = vrcp.pop %v461
      %v1130 = vmul.f32 %v461, %v1129
      %v1131 = vsub.f32 1.0, %v1130
      %v1132 = vmul.f32 %v1129, %v1131
      %v1133 = vadd.f32 %v1129, %v1132
      %vm1134 = vweird.f32 %v461
      %vm1135 = vweird.f32 %v1129
      %vm1136 = vmor %vm1134, %vm1135
      %v1137 = vsel %vm1136, %v1129, %v1133
      %v1138 = vand.u32 2147483647, %v461
      %vm1139 = vcmp.eq.f32.partialorder %v1138, 8.507059e+37
      %v1140 = vand.u32 %v461, 2147483648
      %v1141 = vor.u32 1.1754944e-38, %v1140
      %v1142 = vsel %vm1139, %v1141, %v1137
      %v1143 = vmul.f32 1.0, %v1142
      %v1144 = vrcp.pop %v462
      %v1145 = vmul.f32 %v462, %v1144
      %v1146 = vsub.f32 1.0, %v1145
      %v1147 = vmul.f32 %v1144, %v1146
      %v1148 = vadd.f32 %v1144, %v1147
      %vm1149 = vweird.f32 %v462
      %vm1150 = vweird.f32 %v1144
      %vm1151 = vmor %vm1149, %vm1150
      %v1152 = vsel %vm1151, %v1144, %v1148
      %v1153 = vand.u32 2147483647, %v462
      %vm1154 = vcmp.eq.f32.partialorder %v1153, 8.507059e+37
      %v1155 = vand.u32 %v462, 2147483648
      %v1156 = vor.u32 1.1754944e-38, %v1155
      %v1157 = vsel %vm1154, %v1156, %v1152
      %v1158 = vmul.f32 1.0, %v1157
      %v1159 = vrcp.pop %v463
      %v1160 = vmul.f32 %v463, %v1159
      %v1161 = vsub.f32 1.0, %v1160
      %v1162 = vmul.f32 %v1159, %v1161
      %v1163 = vadd.f32 %v1159, %v1162
      %vm1164 = vweird.f32 %v463
      %vm1165 = vweird.f32 %v1159
      %vm1166 = vmor %vm1164, %vm1165
      %v1167 = vsel %vm1166, %v1159, %v1163
      %v1168 = vand.u32 2147483647, %v463
      %vm1169 = vcmp.eq.f32.partialorder %v1168, 8.507059e+37
      %v1170 = vand.u32 %v463, 2147483648
      %v1171 = vor.u32 1.1754944e-38, %v1170
      %v1172 = vsel %vm1169, %v1171, %v1167
      %v1173 = vmul.f32 1.0, %v1172
      %v1174 = vrcp.pop %v464
      %v1175 = vmul.f32 %v464, %v1174
      %v1176 = vsub.f32 1.0, %v1175
      %v1177 = vmul.f32 %v1174, %v1176
      %v1178 = vadd.f32 %v1174, %v1177
      %vm1179 = vweird.f32 %v464
      %vm1180 = vweird.f32 %v1174
      %vm1181 = vmor %vm1179, %vm1180
      %v1182 = vsel %vm1181, %v1174, %v1178
      %v1183 = vand.u32 2147483647, %v464
      %vm1184 = vcmp.eq.f32.partialorder %v1183, 8.507059e+37
      %v1185 = vand.u32 %v464, 2147483648
      %v1186 = vor.u32 1.1754944e-38, %v1185
      %v1187 = vsel %vm1184, %v1186, %v1182
      %v1188 = vmul.f32 1.0, %v1187
      %v1189 = vrcp.pop %v465
      %v1190 = vmul.f32 %v465, %v1189
      %v1191 = vsub.f32 1.0, %v1190
      %v1192 = vmul.f32 %v1189, %v1191
      %v1193 = vadd.f32 %v1189, %v1192
      %vm1194 = vweird.f32 %v465
      %vm1195 = vweird.f32 %v1189
      %vm1196 = vmor %vm1194, %vm1195
      %v1197 = vsel %vm1196, %v1189, %v1193
      %v1198 = vand.u32 2147483647, %v465
      %vm1199 = vcmp.eq.f32.partialorder %v1198, 8.507059e+37
      %v1200 = vand.u32 %v465, 2147483648
      %v1201 = vor.u32 1.1754944e-38, %v1200
      %v1202 = vsel %vm1199, %v1201, %v1197
      %v1203 = vmul.f32 1.0, %v1202
      %v1204 = vrcp.pop %v466
      %v1205 = vmul.f32 %v466, %v1204
      %v1206 = vsub.f32 1.0, %v1205
      %v1207 = vmul.f32 %v1204, %v1206
      %v1208 = vadd.f32 %v1204, %v1207
      %vm1209 = vweird.f32 %v466
      %vm1210 = vweird.f32 %v1204
      %vm1211 = vmor %vm1209, %vm1210
      %v1212 = vsel %vm1211, %v1204, %v1208
      %v1213 = vand.u32 2147483647, %v466
      %vm1214 = vcmp.eq.f32.partialorder %v1213, 8.507059e+37
      %v1215 = vand.u32 %v466, 2147483648
      %v1216 = vor.u32 1.1754944e-38, %v1215
      %v1217 = vsel %vm1214, %v1216, %v1212
      %v1218 = vmul.f32 1.0, %v1217
      %v1219 = vrcp.pop %v467
      %v1220 = vmul.f32 %v467, %v1219
      %v1221 = vsub.f32 1.0, %v1220
      %v1222 = vmul.f32 %v1219, %v1221
      %v1223 = vadd.f32 %v1219, %v1222
      %vm1224 = vweird.f32 %v467
      %vm1225 = vweird.f32 %v1219
      %vm1226 = vmor %vm1224, %vm1225
      %v1227 = vsel %vm1226, %v1219, %v1223
      %v1228 = vand.u32 2147483647, %v467
      %vm1229 = vcmp.eq.f32.partialorder %v1228, 8.507059e+37
      %v1230 = vand.u32 %v467, 2147483648
      %v1231 = vor.u32 1.1754944e-38, %v1230
      %v1232 = vsel %vm1229, %v1231, %v1227
      %v1233 = vmul.f32 1.0, %v1232
      %v1234 = vrcp.pop %v468
      %v1235 = vmul.f32 %v468, %v1234
      %v1236 = vsub.f32 1.0, %v1235
      %v1237 = vmul.f32 %v1234, %v1236
      %v1238 = vadd.f32 %v1234, %v1237
      %vm1239 = vweird.f32 %v468
      %vm1240 = vweird.f32 %v1234
      %vm1241 = vmor %vm1239, %vm1240
      %v1242 = vsel %vm1241, %v1234, %v1238
      %v1243 = vand.u32 2147483647, %v468
      %vm1244 = vcmp.eq.f32.partialorder %v1243, 8.507059e+37
      %v1245 = vand.u32 %v468, 2147483648
      %v1246 = vor.u32 1.1754944e-38, %v1245
      %v1247 = vsel %vm1244, %v1246, %v1242
      %v1248 = vmul.f32 1.0, %v1247
      %v1249 = vrcp.pop %v469
      %v1250 = vmul.f32 %v469, %v1249
      %v1251 = vsub.f32 1.0, %v1250
      %v1252 = vmul.f32 %v1249, %v1251
      %v1253 = vadd.f32 %v1249, %v1252
      %vm1254 = vweird.f32 %v469
      %vm1255 = vweird.f32 %v1249
      %vm1256 = vmor %vm1254, %vm1255
      %v1257 = vsel %vm1256, %v1249, %v1253
      %v1258 = vand.u32 2147483647, %v469
      %vm1259 = vcmp.eq.f32.partialorder %v1258, 8.507059e+37
      %v1260 = vand.u32 %v469, 2147483648
      %v1261 = vor.u32 1.1754944e-38, %v1260
      %v1262 = vsel %vm1259, %v1261, %v1257
      %v1263 = vmul.f32 1.0, %v1262
      %v1264 = vrcp.pop %v470
      %v1265 = vmul.f32 %v470, %v1264
      %v1266 = vsub.f32 1.0, %v1265
      %v1267 = vmul.f32 %v1264, %v1266
      %v1268 = vadd.f32 %v1264, %v1267
      %vm1269 = vweird.f32 %v470
      %vm1270 = vweird.f32 %v1264
      %vm1271 = vmor %vm1269, %vm1270
      %v1272 = vsel %vm1271, %v1264, %v1268
      %v1273 = vand.u32 2147483647, %v470
      %vm1274 = vcmp.eq.f32.partialorder %v1273, 8.507059e+37
      %v1275 = vand.u32 %v470, 2147483648
      %v1276 = vor.u32 1.1754944e-38, %v1275
      %v1277 = vsel %vm1274, %v1276, %v1272
      %v1278 = vmul.f32 1.0, %v1277
      %v1279 = vrcp.pop %v471
      %v1280 = vmul.f32 %v471, %v1279
      %v1281 = vsub.f32 1.0, %v1280
      %v1282 = vmul.f32 %v1279, %v1281
      %v1283 = vadd.f32 %v1279, %v1282
      %vm1284 = vweird.f32 %v471
      %vm1285 = vweird.f32 %v1279
      %vm1286 = vmor %vm1284, %vm1285
      %v1287 = vsel %vm1286, %v1279, %v1283
      %v1288 = vand.u32 2147483647, %v471
      %vm1289 = vcmp.eq.f32.partialorder %v1288, 8.507059e+37
      %v1290 = vand.u32 %v471, 2147483648
      %v1291 = vor.u32 1.1754944e-38, %v1290
      %v1292 = vsel %vm1289, %v1291, %v1287
      %v1293 = vmul.f32 1.0, %v1292
      %v1294 = vrcp.pop %v472
      %v1295 = vmul.f32 %v472, %v1294
      %v1296 = vsub.f32 1.0, %v1295
      %v1297 = vmul.f32 %v1294, %v1296
      %v1298 = vadd.f32 %v1294, %v1297
      %vm1299 = vweird.f32 %v472
      %vm1300 = vweird.f32 %v1294
      %vm1301 = vmor %vm1299, %vm1300
      %v1302 = vsel %vm1301, %v1294, %v1298
      %v1303 = vand.u32 2147483647, %v472
      %vm1304 = vcmp.eq.f32.partialorder %v1303, 8.507059e+37
      %v1305 = vand.u32 %v472, 2147483648
      %v1306 = vor.u32 1.1754944e-38, %v1305
      %v1307 = vsel %vm1304, %v1306, %v1302
      %v1308 = vmul.f32 1.0, %v1307
      %v1309 = vrcp.pop %v473
      %v1310 = vmul.f32 %v473, %v1309
      %v1311 = vsub.f32 1.0, %v1310
      %v1312 = vmul.f32 %v1309, %v1311
      %v1313 = vadd.f32 %v1309, %v1312
      %vm1314 = vweird.f32 %v473
      %vm1315 = vweird.f32 %v1309
      %vm1316 = vmor %vm1314, %vm1315
      %v1317 = vsel %vm1316, %v1309, %v1313
      %v1318 = vand.u32 2147483647, %v473
      %vm1319 = vcmp.eq.f32.partialorder %v1318, 8.507059e+37
      %v1320 = vand.u32 %v473, 2147483648
      %v1321 = vor.u32 1.1754944e-38, %v1320
      %v1322 = vsel %vm1319, %v1321, %v1317
      %v1323 = vmul.f32 1.0, %v1322
      %v1324 = vrcp.pop %v474
      %v1325 = vmul.f32 %v474, %v1324
      %v1326 = vsub.f32 1.0, %v1325
      %v1327 = vmul.f32 %v1324, %v1326
      %v1328 = vadd.f32 %v1324, %v1327
      %vm1329 = vweird.f32 %v474
      %vm1330 = vweird.f32 %v1324
      %vm1331 = vmor %vm1329, %vm1330
      %v1332 = vsel %vm1331, %v1324, %v1328
      %v1333 = vand.u32 2147483647, %v474
      %vm1334 = vcmp.eq.f32.partialorder %v1333, 8.507059e+37
      %v1335 = vand.u32 %v474, 2147483648
      %v1336 = vor.u32 1.1754944e-38, %v1335
      %v1337 = vsel %vm1334, %v1336, %v1332
      %v1338 = vmul.f32 1.0, %v1337
      %v1339 = vrcp.pop %v475
      %v1340 = vmul.f32 %v475, %v1339
      %v1341 = vsub.f32 1.0, %v1340
      %v1342 = vmul.f32 %v1339, %v1341
      %v1343 = vadd.f32 %v1339, %v1342
      %vm1344 = vweird.f32 %v475
      %vm1345 = vweird.f32 %v1339
      %vm1346 = vmor %vm1344, %vm1345
      %v1347 = vsel %vm1346, %v1339, %v1343
      %v1348 = vand.u32 2147483647, %v475
      %vm1349 = vcmp.eq.f32.partialorder %v1348, 8.507059e+37
      %v1350 = vand.u32 %v475, 2147483648
      %v1351 = vor.u32 1.1754944e-38, %v1350
      %v1352 = vsel %vm1349, %v1351, %v1347
      %v1353 = vmul.f32 1.0, %v1352
      %v1354 = vrcp.pop %v476
      %v1355 = vmul.f32 %v476, %v1354
      %v1356 = vsub.f32 1.0, %v1355
      %v1357 = vmul.f32 %v1354, %v1356
      %v1358 = vadd.f32 %v1354, %v1357
      %vm1359 = vweird.f32 %v476
      %vm1360 = vweird.f32 %v1354
      %vm1361 = vmor %vm1359, %vm1360
      %v1362 = vsel %vm1361, %v1354, %v1358
      %v1363 = vand.u32 2147483647, %v476
      %vm1364 = vcmp.eq.f32.partialorder %v1363, 8.507059e+37
      %v1365 = vand.u32 %v476, 2147483648
      %v1366 = vor.u32 1.1754944e-38, %v1365
      %v1367 = vsel %vm1364, %v1366, %v1362
      %v1368 = vmul.f32 1.0, %v1367
      %v1369 = vrcp.pop %v477
      %v1370 = vmul.f32 %v477, %v1369
      %v1371 = vsub.f32 1.0, %v1370
      %v1372 = vmul.f32 %v1369, %v1371
      %v1373 = vadd.f32 %v1369, %v1372
      %vm1374 = vweird.f32 %v477
      %vm1375 = vweird.f32 %v1369
      %vm1376 = vmor %vm1374, %vm1375
      %v1377 = vsel %vm1376, %v1369, %v1373
      %v1378 = vand.u32 2147483647, %v477
      %vm1379 = vcmp.eq.f32.partialorder %v1378, 8.507059e+37
      %v1380 = vand.u32 %v477, 2147483648
      %v1381 = vor.u32 1.1754944e-38, %v1380
      %v1382 = vsel %vm1379, %v1381, %v1377
      %v1383 = vmul.f32 1.0, %v1382
      %v1384 = vrcp.pop %v478
      %v1385 = vmul.f32 %v478, %v1384
      %v1386 = vsub.f32 1.0, %v1385
      %v1387 = vmul.f32 %v1384, %v1386
      %v1388 = vadd.f32 %v1384, %v1387
      %vm1389 = vweird.f32 %v478
      %vm1390 = vweird.f32 %v1384
      %vm1391 = vmor %vm1389, %vm1390
      %v1392 = vsel %vm1391, %v1384, %v1388
      %v1393 = vand.u32 2147483647, %v478
      %vm1394 = vcmp.eq.f32.partialorder %v1393, 8.507059e+37
      %v1395 = vand.u32 %v478, 2147483648
      %v1396 = vor.u32 1.1754944e-38, %v1395
      %v1397 = vsel %vm1394, %v1396, %v1392
      %v1398 = vmul.f32 1.0, %v1397
      %v1399 = vrcp.pop %v479
      %v1400 = vmul.f32 %v479, %v1399
      %v1401 = vsub.f32 1.0, %v1400
      %v1402 = vmul.f32 %v1399, %v1401
      %v1403 = vadd.f32 %v1399, %v1402
      %vm1404 = vweird.f32 %v479
      %vm1405 = vweird.f32 %v1399
      %vm1406 = vmor %vm1404, %vm1405
      %v1407 = vsel %vm1406, %v1399, %v1403
      %v1408 = vand.u32 2147483647, %v479
      %vm1409 = vcmp.eq.f32.partialorder %v1408, 8.507059e+37
      %v1410 = vand.u32 %v479, 2147483648
      %v1411 = vor.u32 1.1754944e-38, %v1410
      %v1412 = vsel %vm1409, %v1411, %v1407
      %v1413 = vmul.f32 1.0, %v1412
      %v1414 = vrcp.pop %v480
      %v1415 = vmul.f32 %v480, %v1414
      %v1416 = vsub.f32 1.0, %v1415
      %v1417 = vmul.f32 %v1414, %v1416
      %v1418 = vadd.f32 %v1414, %v1417
      %vm1419 = vweird.f32 %v480
      %vm1420 = vweird.f32 %v1414
      %vm1421 = vmor %vm1419, %vm1420
      %v1422 = vsel %vm1421, %v1414, %v1418
      %v1423 = vand.u32 2147483647, %v480
      %vm1424 = vcmp.eq.f32.partialorder %v1423, 8.507059e+37
      %v1425 = vand.u32 %v480, 2147483648
      %v1426 = vor.u32 1.1754944e-38, %v1425
      %v1427 = vsel %vm1424, %v1426, %v1422
      %v1428 = vmul.f32 1.0, %v1427
      %v1429 = vrcp.pop %v481
      %v1430 = vmul.f32 %v481, %v1429
      %v1431 = vsub.f32 1.0, %v1430
      %v1432 = vmul.f32 %v1429, %v1431
      %v1433 = vadd.f32 %v1429, %v1432
      %vm1434 = vweird.f32 %v481
      %vm1435 = vweird.f32 %v1429
      %vm1436 = vmor %vm1434, %vm1435
      %v1437 = vsel %vm1436, %v1429, %v1433
      %v1438 = vand.u32 2147483647, %v481
      %vm1439 = vcmp.eq.f32.partialorder %v1438, 8.507059e+37
      %v1440 = vand.u32 %v481, 2147483648
      %v1441 = vor.u32 1.1754944e-38, %v1440
      %v1442 = vsel %vm1439, %v1441, %v1437
      %v1443 = vmul.f32 1.0, %v1442
      %v1444 = vrcp.pop %v482
      %v1445 = vmul.f32 %v482, %v1444
      %v1446 = vsub.f32 1.0, %v1445
      %v1447 = vmul.f32 %v1444, %v1446
      %v1448 = vadd.f32 %v1444, %v1447
      %vm1449 = vweird.f32 %v482
      %vm1450 = vweird.f32 %v1444
      %vm1451 = vmor %vm1449, %vm1450
      %v1452 = vsel %vm1451, %v1444, %v1448
      %v1453 = vand.u32 2147483647, %v482
      %vm1454 = vcmp.eq.f32.partialorder %v1453, 8.507059e+37
      %v1455 = vand.u32 %v482, 2147483648
      %v1456 = vor.u32 1.1754944e-38, %v1455
      %v1457 = vsel %vm1454, %v1456, %v1452
      %v1458 = vmul.f32 1.0, %v1457
      %v1459 = vrcp.pop %v483
      %v1460 = vmul.f32 %v483, %v1459
      %v1461 = vsub.f32 1.0, %v1460
      %v1462 = vmul.f32 %v1459, %v1461
      %v1463 = vadd.f32 %v1459, %v1462
      %vm1464 = vweird.f32 %v483
      %vm1465 = vweird.f32 %v1459
      %vm1466 = vmor %vm1464, %vm1465
      %v1467 = vsel %vm1466, %v1459, %v1463
      %v1468 = vand.u32 2147483647, %v483
      %vm1469 = vcmp.eq.f32.partialorder %v1468, 8.507059e+37
      %v1470 = vand.u32 %v483, 2147483648
      %v1471 = vor.u32 1.1754944e-38, %v1470
      %v1472 = vsel %vm1469, %v1471, %v1467
      %v1473 = vmul.f32 1.0, %v1472
      %v1474 = vld [vmem:[%s143] sm:$0xff]
      %v1475 = vld [vmem:[%s143 + $0x8] sm:$0xff]
      %v1476 = vld [vmem:[%s143 + $0x10] sm:$0xff]
      %v1477 = vld [vmem:[%s143 + $0x18] sm:$0xff]
      %v1478 = vld [vmem:[%s143 + $0x20] sm:$0xff]
      %v1479 = vld [vmem:[%s143 + $0x28] sm:$0xff]
      %v1480 = vld [vmem:[%s143 + $0x30] sm:$0xff]
      %v1481 = vld [vmem:[%s143 + $0x38] sm:$0xff]
      %v1482 = vld [vmem:[%s143 + $0x40] sm:$0xff]
      %v1483 = vld [vmem:[%s143 + $0x48] sm:$0xff]
      %v1484 = vld [vmem:[%s143 + $0x50] sm:$0xff]
      %v1485 = vld [vmem:[%s143 + $0x58] sm:$0xff]
      %v1486 = vld [vmem:[%s143 + $0x60] sm:$0xff]
      %v1487 = vld [vmem:[%s143 + $0x68] sm:$0xff]
      %v1488 = vld [vmem:[%s143 + $0x70] sm:$0xff]
      %v1489 = vld [vmem:[%s143 + $0x78] sm:$0xff]
      %v1490 = vld [vmem:[%s143 + $0x80] sm:$0xff]
      %v1491 = vld [vmem:[%s143 + $0x88] sm:$0xff]
      %v1492 = vld [vmem:[%s143 + $0x90] sm:$0xff]
      %v1493 = vld [vmem:[%s143 + $0x98] sm:$0xff]
      %v1494 = vld [vmem:[%s143 + $0xa0] sm:$0xff]
      %v1495 = vld [vmem:[%s143 + $0xa8] sm:$0xff]
      %v1496 = vld [vmem:[%s143 + $0xb0] sm:$0xff]
      %v1497 = vld [vmem:[%s143 + $0xb8] sm:$0xff]
      %v1498 = vld [vmem:[%s143 + $0xc0] sm:$0xff]
      %v1499 = vld [vmem:[%s143 + $0xc8] sm:$0xff]
      %v1500 = vld [vmem:[%s143 + $0xd0] sm:$0xff]
      %v1501 = vld [vmem:[%s143 + $0xd8] sm:$0xff]
      %v1502 = vld [vmem:[%s143 + $0xe0] sm:$0xff]
      %v1503 = vld [vmem:[%s143 + $0xe8] sm:$0xff]
      %v1504 = vld [vmem:[%s143 + $0xf0] sm:$0xff]
      %v1505 = vld [vmem:[%s143 + $0xf8] sm:$0xff]
      %v1506 = vld [vmem:[%s143 + $0x100] sm:$0xff]
      %v1507 = vld [vmem:[%s143 + $0x108] sm:$0xff]
      %v1508 = vld [vmem:[%s143 + $0x110] sm:$0xff]
      %v1509 = vld [vmem:[%s143 + $0x118] sm:$0xff]
      %v1510 = vld [vmem:[%s143 + $0x120] sm:$0xff]
      %v1511 = vld [vmem:[%s143 + $0x128] sm:$0xff]
      %v1512 = vld [vmem:[%s143 + $0x130] sm:$0xff]
      %v1513 = vld [vmem:[%s143 + $0x138] sm:$0xff]
      %v1514 = vld [vmem:[%s143 + $0x140] sm:$0xff]
      %v1515 = vld [vmem:[%s143 + $0x148] sm:$0xff]
      %v1516 = vld [vmem:[%s143 + $0x150] sm:$0xff]
      %v1517 = vld [vmem:[%s143 + $0x158] sm:$0xff]
      %v1518 = vld [vmem:[%s143 + $0x160] sm:$0xff]
      %v1519 = vld [vmem:[%s143 + $0x168] sm:$0xff]
      %v1520 = vld [vmem:[%s143 + $0x170] sm:$0xff]
      %v1521 = vld [vmem:[%s143 + $0x178] sm:$0xff]
      %v1522 = vld [vmem:[%s143 + $0x180] sm:$0xff]
      %v1523 = vld [vmem:[%s143 + $0x188] sm:$0xff]
      %v1524 = vld [vmem:[%s143 + $0x190] sm:$0xff]
      %v1525 = vld [vmem:[%s143 + $0x198] sm:$0xff]
      %v1526 = vld [vmem:[%s143 + $0x1a0] sm:$0xff]
      %v1527 = vld [vmem:[%s143 + $0x1a8] sm:$0xff]
      %v1528 = vld [vmem:[%s143 + $0x1b0] sm:$0xff]
      %v1529 = vld [vmem:[%s143 + $0x1b8] sm:$0xff]
      %v1530 = vld [vmem:[%s143 + $0x1c0] sm:$0xff]
      %v1531 = vld [vmem:[%s143 + $0x1c8] sm:$0xff]
      %v1532 = vld [vmem:[%s143 + $0x1d0] sm:$0xff]
      %v1533 = vld [vmem:[%s143 + $0x1d8] sm:$0xff]
      %v1534 = vld [vmem:[%s143 + $0x1e0] sm:$0xff]
      %v1535 = vld [vmem:[%s143 + $0x1e8] sm:$0xff]
      %v1536 = vld [vmem:[%s143 + $0x1f0] sm:$0xff]
      %v1537 = vld [vmem:[%s143 + $0x1f8] sm:$0xff]
      %v1538 = vld [vmem:[%s143 + $0x200] sm:$0xff]
      %v1539 = vld [vmem:[%s143 + $0x208] sm:$0xff]
      %v1540 = vld [vmem:[%s143 + $0x210] sm:$0xff]
      %v1541 = vld [vmem:[%s143 + $0x218] sm:$0xff]
      %v1542 = vld [vmem:[%s143 + $0x220] sm:$0xff]
      %v1543 = vld [vmem:[%s143 + $0x228] sm:$0xff]
      %v1544 = vld [vmem:[%s143 + $0x230] sm:$0xff]
      %v1545 = vld [vmem:[%s143 + $0x238] sm:$0xff]
      %v1546 = vld [vmem:[%s143 + $0x240] sm:$0xff]
      %v1547 = vld [vmem:[%s143 + $0x248] sm:$0xff]
      %v1548 = vld [vmem:[%s143 + $0x250] sm:$0xff]
      %v1549 = vld [vmem:[%s143 + $0x258] sm:$0xff]
      %v1550 = vld [vmem:[%s143 + $0x260] sm:$0xff]
      %v1551 = vld [vmem:[%s143 + $0x268] sm:$0xff]
      %v1552 = vld [vmem:[%s143 + $0x270] sm:$0xff]
      %v1553 = vld [vmem:[%s143 + $0x278] sm:$0xff]
      %v1554 = vld [vmem:[%s143 + $0x280] sm:$0xff]
      %v1555 = vld [vmem:[%s143 + $0x288] sm:$0xff]
      %v1556 = vld [vmem:[%s143 + $0x290] sm:$0xff]
      %v1557 = vld [vmem:[%s143 + $0x298] sm:$0xff]
      %v1558 = vld [vmem:[%s143 + $0x2a0] sm:$0xff]
      %v1559 = vld [vmem:[%s143 + $0x2a8] sm:$0xff]
      %v1560 = vld [vmem:[%s143 + $0x2b0] sm:$0xff]
      %v1561 = vld [vmem:[%s143 + $0x2b8] sm:$0xff]
      %v1562 = vld [vmem:[%s143 + $0x2c0] sm:$0xff]
      %v1563 = vld [vmem:[%s143 + $0x2c8] sm:$0xff]
      %v1564 = vld [vmem:[%s143 + $0x2d0] sm:$0xff]
      %v1565 = vld [vmem:[%s143 + $0x2d8] sm:$0xff]
      %v1566 = vld [vmem:[%s143 + $0x2e0] sm:$0xff]
      %v1567 = vld [vmem:[%s143 + $0x2e8] sm:$0xff]
      %v1568 = vld [vmem:[%s143 + $0x2f0] sm:$0xff]
      %v1569 = vld [vmem:[%s143 + $0x2f8] sm:$0xff]
      %v1570 = vld [vmem:[%s143 + $0x300] sm:$0xff]
      %v1571 = vld [vmem:[%s143 + $0x308] sm:$0xff]
      %v1572 = vld [vmem:[%s143 + $0x310] sm:$0xff]
      %v1573 = vld [vmem:[%s143 + $0x318] sm:$0xff]
      %v1574 = vld [vmem:[%s143 + $0x320] sm:$0xff]
      %v1575 = vld [vmem:[%s143 + $0x328] sm:$0xff]
      %v1576 = vld [vmem:[%s143 + $0x330] sm:$0xff]
      %v1577 = vld [vmem:[%s143 + $0x338] sm:$0xff]
      %v1578 = vld [vmem:[%s143 + $0x340] sm:$0xff]
      %v1579 = vld [vmem:[%s143 + $0x348] sm:$0xff]
      %v1580 = vld [vmem:[%s143 + $0x350] sm:$0xff]
      %v1581 = vld [vmem:[%s143 + $0x358] sm:$0xff]
      %v1582 = vld [vmem:[%s143 + $0x360] sm:$0xff]
      %v1583 = vld [vmem:[%s143 + $0x368] sm:$0xff]
      %v1584 = vld [vmem:[%s143 + $0x370] sm:$0xff]
      %v1585 = vld [vmem:[%s143 + $0x378] sm:$0xff]
      %v1586 = vld [vmem:[%s143 + $0x380] sm:$0xff]
      %v1587 = vld [vmem:[%s143 + $0x388] sm:$0xff]
      %v1588 = vld [vmem:[%s143 + $0x390] sm:$0xff]
      %v1589 = vld [vmem:[%s143 + $0x398] sm:$0xff]
      %v1590 = vld [vmem:[%s143 + $0x3a0] sm:$0xff]
      %v1591 = vld [vmem:[%s143 + $0x3a8] sm:$0xff]
      %v1592 = vld [vmem:[%s143 + $0x3b0] sm:$0xff]
      %v1593 = vld [vmem:[%s143 + $0x3b8] sm:$0xff]
      %v1594 = vld [vmem:[%s143 + $0x3c0] sm:$0xff]
      %v1595 = vld [vmem:[%s143 + $0x3c8] sm:$0xff]
      %v1596 = vld [vmem:[%s143 + $0x3d0] sm:$0xff]
      %v1597 = vld [vmem:[%s143 + $0x3d8] sm:$0xff]
      %v1598 = vld [vmem:[%s143 + $0x3e0] sm:$0xff]
      %v1599 = vld [vmem:[%s143 + $0x3e8] sm:$0xff]
      %v1600 = vld [vmem:[%s143 + $0x3f0] sm:$0xff]
      %v1601 = vld [vmem:[%s143 + $0x3f8] sm:$0xff]
      %v1602 = vld [vmem:[%s143 + $0x400] sm:$0xff]
      %v1603 = vld [vmem:[%s143 + $0x408] sm:$0xff]
      %v1604 = vld [vmem:[%s143 + $0x410] sm:$0xff]
      %v1605 = vld [vmem:[%s143 + $0x418] sm:$0xff]
      %1607 = vset.pattern.permute.xlu0 0
      %1608 = vperm.xlu0 %1607, %v498
      %v1609 = vpop.permute.xlu0 %1608
      %1612 = vset.pattern.permute.xlu0 0
      %1613 = vperm.xlu0 %1612, %v513
      %v1614 = vpop.permute.xlu0 %1613
      %1617 = vset.pattern.permute.xlu0 0
      %1618 = vperm.xlu0 %1617, %v528
      %v1619 = vpop.permute.xlu0 %1618
      %1622 = vset.pattern.permute.xlu0 0
      %1623 = vperm.xlu0 %1622, %v543
      %v1624 = vpop.permute.xlu0 %1623
      %1627 = vset.pattern.permute.xlu0 0
      %1628 = vperm.xlu0 %1627, %v558
      %v1629 = vpop.permute.xlu0 %1628
      %1632 = vset.pattern.permute.xlu0 0
      %1633 = vperm.xlu0 %1632, %v573
      %v1634 = vpop.permute.xlu0 %1633
      %1637 = vset.pattern.permute.xlu0 0
      %1638 = vperm.xlu0 %1637, %v588
      %v1639 = vpop.permute.xlu0 %1638
      %1642 = vset.pattern.permute.xlu0 0
      %1643 = vperm.xlu0 %1642, %v603
      %v1644 = vpop.permute.xlu0 %1643
      %1647 = vset.pattern.permute.xlu0 0
      %1648 = vperm.xlu0 %1647, %v618
      %v1649 = vpop.permute.xlu0 %1648
      %1652 = vset.pattern.permute.xlu0 0
      %1653 = vperm.xlu0 %1652, %v633
      %v1654 = vpop.permute.xlu0 %1653
      %1657 = vset.pattern.permute.xlu0 0
      %1658 = vperm.xlu0 %1657, %v648
      %v1659 = vpop.permute.xlu0 %1658
      %1662 = vset.pattern.permute.xlu0 0
      %1663 = vperm.xlu0 %1662, %v663
      %v1664 = vpop.permute.xlu0 %1663
      %1667 = vset.pattern.permute.xlu0 0
      %1668 = vperm.xlu0 %1667, %v678
      %v1669 = vpop.permute.xlu0 %1668
      %1672 = vset.pattern.permute.xlu0 0
      %1673 = vperm.xlu0 %1672, %v693
      %v1674 = vpop.permute.xlu0 %1673
      %1677 = vset.pattern.permute.xlu0 0
      %1678 = vperm.xlu0 %1677, %v708
      %v1679 = vpop.permute.xlu0 %1678
      %1682 = vset.pattern.permute.xlu0 0
      %1683 = vperm.xlu0 %1682, %v723
      %v1684 = vpop.permute.xlu0 %1683
      %1687 = vset.pattern.permute.xlu0 0
      %1688 = vperm.xlu0 %1687, %v738
      %v1689 = vpop.permute.xlu0 %1688
      %1692 = vset.pattern.permute.xlu0 0
      %1693 = vperm.xlu0 %1692, %v753
      %v1694 = vpop.permute.xlu0 %1693
      %1697 = vset.pattern.permute.xlu0 0
      %1698 = vperm.xlu0 %1697, %v768
      %v1699 = vpop.permute.xlu0 %1698
      %1702 = vset.pattern.permute.xlu0 0
      %1703 = vperm.xlu0 %1702, %v783
      %v1704 = vpop.permute.xlu0 %1703
      %1707 = vset.pattern.permute.xlu0 0
      %1708 = vperm.xlu0 %1707, %v798
      %v1709 = vpop.permute.xlu0 %1708
      %1712 = vset.pattern.permute.xlu0 0
      %1713 = vperm.xlu0 %1712, %v813
      %v1714 = vpop.permute.xlu0 %1713
      %1717 = vset.pattern.permute.xlu0 0
      %1718 = vperm.xlu0 %1717, %v828
      %v1719 = vpop.permute.xlu0 %1718
      %1722 = vset.pattern.permute.xlu0 0
      %1723 = vperm.xlu0 %1722, %v843
      %v1724 = vpop.permute.xlu0 %1723
      %1727 = vset.pattern.permute.xlu0 0
      %1728 = vperm.xlu0 %1727, %v858
      %v1729 = vpop.permute.xlu0 %1728
      %1732 = vset.pattern.permute.xlu0 0
      %1733 = vperm.xlu0 %1732, %v873
      %v1734 = vpop.permute.xlu0 %1733
      %1737 = vset.pattern.permute.xlu0 0
      %1738 = vperm.xlu0 %1737, %v888
      %v1739 = vpop.permute.xlu0 %1738
      %1742 = vset.pattern.permute.xlu0 0
      %1743 = vperm.xlu0 %1742, %v903
      %v1744 = vpop.permute.xlu0 %1743
      %1747 = vset.pattern.permute.xlu0 0
      %1748 = vperm.xlu0 %1747, %v918
      %v1749 = vpop.permute.xlu0 %1748
      %1752 = vset.pattern.permute.xlu0 0
      %1753 = vperm.xlu0 %1752, %v933
      %v1754 = vpop.permute.xlu0 %1753
      %1757 = vset.pattern.permute.xlu0 0
      %1758 = vperm.xlu0 %1757, %v948
      %v1759 = vpop.permute.xlu0 %1758
      %1762 = vset.pattern.permute.xlu0 0
      %1763 = vperm.xlu0 %1762, %v963
      %v1764 = vpop.permute.xlu0 %1763
      %1767 = vset.pattern.permute.xlu0 0
      %1768 = vperm.xlu0 %1767, %v978
      %v1769 = vpop.permute.xlu0 %1768
      %1772 = vset.pattern.permute.xlu0 0
      %1773 = vperm.xlu0 %1772, %v993
      %v1774 = vpop.permute.xlu0 %1773
      %1777 = vset.pattern.permute.xlu0 0
      %1778 = vperm.xlu0 %1777, %v1008
      %v1779 = vpop.permute.xlu0 %1778
      %1782 = vset.pattern.permute.xlu0 0
      %1783 = vperm.xlu0 %1782, %v1023
      %v1784 = vpop.permute.xlu0 %1783
      %1787 = vset.pattern.permute.xlu0 0
      %1788 = vperm.xlu0 %1787, %v1038
      %v1789 = vpop.permute.xlu0 %1788
      %1792 = vset.pattern.permute.xlu0 0
      %1793 = vperm.xlu0 %1792, %v1053
      %v1794 = vpop.permute.xlu0 %1793
      %1797 = vset.pattern.permute.xlu0 0
      %1798 = vperm.xlu0 %1797, %v1068
      %v1799 = vpop.permute.xlu0 %1798
      %1802 = vset.pattern.permute.xlu0 0
      %1803 = vperm.xlu0 %1802, %v1083
      %v1804 = vpop.permute.xlu0 %1803
      %1807 = vset.pattern.permute.xlu0 0
      %1808 = vperm.xlu0 %1807, %v1098
      %v1809 = vpop.permute.xlu0 %1808
      %1812 = vset.pattern.permute.xlu0 0
      %1813 = vperm.xlu0 %1812, %v1113
      %v1814 = vpop.permute.xlu0 %1813
      %1817 = vset.pattern.permute.xlu0 0
      %1818 = vperm.xlu0 %1817, %v1128
      %v1819 = vpop.permute.xlu0 %1818
      %1822 = vset.pattern.permute.xlu0 0
      %1823 = vperm.xlu0 %1822, %v1143
      %v1824 = vpop.permute.xlu0 %1823
      %1827 = vset.pattern.permute.xlu0 0
      %1828 = vperm.xlu0 %1827, %v1158
      %v1829 = vpop.permute.xlu0 %1828
      %1832 = vset.pattern.permute.xlu0 0
      %1833 = vperm.xlu0 %1832, %v1173
      %v1834 = vpop.permute.xlu0 %1833
      %1837 = vset.pattern.permute.xlu0 0
      %1838 = vperm.xlu0 %1837, %v1188
      %v1839 = vpop.permute.xlu0 %1838
      %1842 = vset.pattern.permute.xlu0 0
      %1843 = vperm.xlu0 %1842, %v1203
      %v1844 = vpop.permute.xlu0 %1843
      %1847 = vset.pattern.permute.xlu0 0
      %1848 = vperm.xlu0 %1847, %v1218
      %v1849 = vpop.permute.xlu0 %1848
      %1852 = vset.pattern.permute.xlu0 0
      %1853 = vperm.xlu0 %1852, %v1233
      %v1854 = vpop.permute.xlu0 %1853
      %1857 = vset.pattern.permute.xlu0 0
      %1858 = vperm.xlu0 %1857, %v1248
      %v1859 = vpop.permute.xlu0 %1858
      %1862 = vset.pattern.permute.xlu0 0
      %1863 = vperm.xlu0 %1862, %v1263
      %v1864 = vpop.permute.xlu0 %1863
      %1867 = vset.pattern.permute.xlu0 0
      %1868 = vperm.xlu0 %1867, %v1278
      %v1869 = vpop.permute.xlu0 %1868
      %1872 = vset.pattern.permute.xlu0 0
      %1873 = vperm.xlu0 %1872, %v1293
      %v1874 = vpop.permute.xlu0 %1873
      %1877 = vset.pattern.permute.xlu0 0
      %1878 = vperm.xlu0 %1877, %v1308
      %v1879 = vpop.permute.xlu0 %1878
      %1882 = vset.pattern.permute.xlu0 0
      %1883 = vperm.xlu0 %1882, %v1323
      %v1884 = vpop.permute.xlu0 %1883
      %1887 = vset.pattern.permute.xlu0 0
      %1888 = vperm.xlu0 %1887, %v1338
      %v1889 = vpop.permute.xlu0 %1888
      %1892 = vset.pattern.permute.xlu0 0
      %1893 = vperm.xlu0 %1892, %v1353
      %v1894 = vpop.permute.xlu0 %1893
      %1897 = vset.pattern.permute.xlu0 0
      %1898 = vperm.xlu0 %1897, %v1368
      %v1899 = vpop.permute.xlu0 %1898
      %1902 = vset.pattern.permute.xlu0 0
      %1903 = vperm.xlu0 %1902, %v1383
      %v1904 = vpop.permute.xlu0 %1903
      %1907 = vset.pattern.permute.xlu0 0
      %1908 = vperm.xlu0 %1907, %v1398
      %v1909 = vpop.permute.xlu0 %1908
      %1912 = vset.pattern.permute.xlu0 0
      %1913 = vperm.xlu0 %1912, %v1413
      %v1914 = vpop.permute.xlu0 %1913
      %1917 = vset.pattern.permute.xlu0 0
      %1918 = vperm.xlu0 %1917, %v1428
      %v1919 = vpop.permute.xlu0 %1918
      %1922 = vset.pattern.permute.xlu0 0
      %1923 = vperm.xlu0 %1922, %v1443
      %v1924 = vpop.permute.xlu0 %1923
      %1927 = vset.pattern.permute.xlu0 0
      %1928 = vperm.xlu0 %1927, %v1458
      %v1929 = vpop.permute.xlu0 %1928
      %1932 = vset.pattern.permute.xlu0 0
      %1933 = vperm.xlu0 %1932, %v1473
      %v1934 = vpop.permute.xlu0 %1933
      %v1936 = vmul.f32 %v1474, %v1609
      %v1937 = vmul.f32 %v1475, %v1609
      %v1938 = vmul.f32 %v1476, %v1614
      %v1939 = vmul.f32 %v1477, %v1614
      %v1940 = vmul.f32 %v1478, %v1619
      %v1941 = vmul.f32 %v1479, %v1619
      %v1942 = vmul.f32 %v1480, %v1624
      %v1943 = vmul.f32 %v1481, %v1624
      %v1944 = vmul.f32 %v1482, %v1629
      %v1945 = vmul.f32 %v1483, %v1629
      %v1946 = vmul.f32 %v1484, %v1634
      %v1947 = vmul.f32 %v1485, %v1634
      %v1948 = vmul.f32 %v1486, %v1639
      %v1949 = vmul.f32 %v1487, %v1639
      %v1950 = vmul.f32 %v1488, %v1644
      %v1951 = vmul.f32 %v1489, %v1644
      %v1952 = vmul.f32 %v1490, %v1649
      %v1953 = vmul.f32 %v1491, %v1649
      %v1954 = vmul.f32 %v1492, %v1654
      %v1955 = vmul.f32 %v1493, %v1654
      %v1956 = vmul.f32 %v1494, %v1659
      %v1957 = vmul.f32 %v1495, %v1659
      %v1958 = vmul.f32 %v1496, %v1664
      %v1959 = vmul.f32 %v1497, %v1664
      %v1960 = vmul.f32 %v1498, %v1669
      %v1961 = vmul.f32 %v1499, %v1669
      %v1962 = vmul.f32 %v1500, %v1674
      %v1963 = vmul.f32 %v1501, %v1674
      %v1964 = vmul.f32 %v1502, %v1679
      %v1965 = vmul.f32 %v1503, %v1679
      %v1966 = vmul.f32 %v1504, %v1684
      %v1967 = vmul.f32 %v1505, %v1684
      %v1968 = vmul.f32 %v1506, %v1689
      %v1969 = vmul.f32 %v1507, %v1689
      %v1970 = vmul.f32 %v1508, %v1694
      %v1971 = vmul.f32 %v1509, %v1694
      %v1972 = vmul.f32 %v1510, %v1699
      %v1973 = vmul.f32 %v1511, %v1699
      %v1974 = vmul.f32 %v1512, %v1704
      %v1975 = vmul.f32 %v1513, %v1704
      %v1976 = vmul.f32 %v1514, %v1709
      %v1977 = vmul.f32 %v1515, %v1709
      %v1978 = vmul.f32 %v1516, %v1714
      %v1979 = vmul.f32 %v1517, %v1714
      %v1980 = vmul.f32 %v1518, %v1719
      %v1981 = vmul.f32 %v1519, %v1719
      %v1982 = vmul.f32 %v1520, %v1724
      %v1983 = vmul.f32 %v1521, %v1724
      %v1984 = vmul.f32 %v1522, %v1729
      %v1985 = vmul.f32 %v1523, %v1729
      %v1986 = vmul.f32 %v1524, %v1734
      %v1987 = vmul.f32 %v1525, %v1734
      %v1988 = vmul.f32 %v1526, %v1739
      %v1989 = vmul.f32 %v1527, %v1739
      %v1990 = vmul.f32 %v1528, %v1744
      %v1991 = vmul.f32 %v1529, %v1744
      %v1992 = vmul.f32 %v1530, %v1749
      %v1993 = vmul.f32 %v1531, %v1749
      %v1994 = vmul.f32 %v1532, %v1754
      %v1995 = vmul.f32 %v1533, %v1754
      %v1996 = vmul.f32 %v1534, %v1759
      %v1997 = vmul.f32 %v1535, %v1759
      %v1998 = vmul.f32 %v1536, %v1764
      %v1999 = vmul.f32 %v1537, %v1764
      %v2000 = vmul.f32 %v1538, %v1769
      %v2001 = vmul.f32 %v1539, %v1769
      %v2002 = vmul.f32 %v1540, %v1774
      %v2003 = vmul.f32 %v1541, %v1774
      %v2004 = vmul.f32 %v1542, %v1779
      %v2005 = vmul.f32 %v1543, %v1779
      %v2006 = vmul.f32 %v1544, %v1784
      %v2007 = vmul.f32 %v1545, %v1784
      %v2008 = vmul.f32 %v1546, %v1789
      %v2009 = vmul.f32 %v1547, %v1789
      %v2010 = vmul.f32 %v1548, %v1794
      %v2011 = vmul.f32 %v1549, %v1794
      %v2012 = vmul.f32 %v1550, %v1799
      %v2013 = vmul.f32 %v1551, %v1799
      %v2014 = vmul.f32 %v1552, %v1804
      %v2015 = vmul.f32 %v1553, %v1804
      %v2016 = vmul.f32 %v1554, %v1809
      %v2017 = vmul.f32 %v1555, %v1809
      %v2018 = vmul.f32 %v1556, %v1814
      %v2019 = vmul.f32 %v1557, %v1814
      %v2020 = vmul.f32 %v1558, %v1819
      %v2021 = vmul.f32 %v1559, %v1819
      %v2022 = vmul.f32 %v1560, %v1824
      %v2023 = vmul.f32 %v1561, %v1824
      %v2024 = vmul.f32 %v1562, %v1829
      %v2025 = vmul.f32 %v1563, %v1829
      %v2026 = vmul.f32 %v1564, %v1834
      %v2027 = vmul.f32 %v1565, %v1834
      %v2028 = vmul.f32 %v1566, %v1839
      %v2029 = vmul.f32 %v1567, %v1839
      %v2030 = vmul.f32 %v1568, %v1844
      %v2031 = vmul.f32 %v1569, %v1844
      %v2032 = vmul.f32 %v1570, %v1849
      %v2033 = vmul.f32 %v1571, %v1849
      %v2034 = vmul.f32 %v1572, %v1854
      %v2035 = vmul.f32 %v1573, %v1854
      %v2036 = vmul.f32 %v1574, %v1859
      %v2037 = vmul.f32 %v1575, %v1859
      %v2038 = vmul.f32 %v1576, %v1864
      %v2039 = vmul.f32 %v1577, %v1864
      %v2040 = vmul.f32 %v1578, %v1869
      %v2041 = vmul.f32 %v1579, %v1869
      %v2042 = vmul.f32 %v1580, %v1874
      %v2043 = vmul.f32 %v1581, %v1874
      %v2044 = vmul.f32 %v1582, %v1879
      %v2045 = vmul.f32 %v1583, %v1879
      %v2046 = vmul.f32 %v1584, %v1884
      %v2047 = vmul.f32 %v1585, %v1884
      %v2048 = vmul.f32 %v1586, %v1889
      %v2049 = vmul.f32 %v1587, %v1889
      %v2050 = vmul.f32 %v1588, %v1894
      %v2051 = vmul.f32 %v1589, %v1894
      %v2052 = vmul.f32 %v1590, %v1899
      %v2053 = vmul.f32 %v1591, %v1899
      %v2054 = vmul.f32 %v1592, %v1904
      %v2055 = vmul.f32 %v1593, %v1904
      %v2056 = vmul.f32 %v1594, %v1909
      %v2057 = vmul.f32 %v1595, %v1909
      %v2058 = vmul.f32 %v1596, %v1914
      %v2059 = vmul.f32 %v1597, %v1914
      %v2060 = vmul.f32 %v1598, %v1919
      %v2061 = vmul.f32 %v1599, %v1919
      %v2062 = vmul.f32 %v1600, %v1924
      %v2063 = vmul.f32 %v1601, %v1924
      %v2064 = vmul.f32 %v1602, %v1929
      %v2065 = vmul.f32 %v1603, %v1929
      %v2066 = vmul.f32 %v1604, %v1934
      %v2067 = vmul.f32 %v1605, %v1934
      %2068 = vst [vmem:[%s150] sm:$0xff] %v1936
      %vm2069 = vcmask 556032
      %2070 = vst.msk [vmem:[%s150 + $0x8] sm:$0xff] %vm2069, %v1937
      %2071 = vst [vmem:[%s150 + $0x10] sm:$0xff] %v1938
      %2072 = vst.msk [vmem:[%s150 + $0x18] sm:$0xff] %vm2069, %v1939
      %2073 = vst [vmem:[%s150 + $0x20] sm:$0xff] %v1940
      %2074 = vst.msk [vmem:[%s150 + $0x28] sm:$0xff] %vm2069, %v1941
      %2075 = vst [vmem:[%s150 + $0x30] sm:$0xff] %v1942
      %2076 = vst.msk [vmem:[%s150 + $0x38] sm:$0xff] %vm2069, %v1943
      %2077 = vst [vmem:[%s150 + $0x40] sm:$0xff] %v1944
      %2078 = vst.msk [vmem:[%s150 + $0x48] sm:$0xff] %vm2069, %v1945
      %2079 = vst [vmem:[%s150 + $0x50] sm:$0xff] %v1946
      %2080 = vst.msk [vmem:[%s150 + $0x58] sm:$0xff] %vm2069, %v1947
      %2081 = vst [vmem:[%s150 + $0x60] sm:$0xff] %v1948
      %2082 = vst.msk [vmem:[%s150 + $0x68] sm:$0xff] %vm2069, %v1949
      %2083 = vst [vmem:[%s150 + $0x70] sm:$0xff] %v1950
      %2084 = vst.msk [vmem:[%s150 + $0x78] sm:$0xff] %vm2069, %v1951
      %2085 = vst [vmem:[%s150 + $0x80] sm:$0xff] %v1952
      %2086 = vst.msk [vmem:[%s150 + $0x88] sm:$0xff] %vm2069, %v1953
      %2087 = vst [vmem:[%s150 + $0x90] sm:$0xff] %v1954
      %2088 = vst.msk [vmem:[%s150 + $0x98] sm:$0xff] %vm2069, %v1955
      %2089 = vst [vmem:[%s150 + $0xa0] sm:$0xff] %v1956
      %2090 = vst.msk [vmem:[%s150 + $0xa8] sm:$0xff] %vm2069, %v1957
      %2091 = vst [vmem:[%s150 + $0xb0] sm:$0xff] %v1958
      %2092 = vst.msk [vmem:[%s150 + $0xb8] sm:$0xff] %vm2069, %v1959
      %2093 = vst [vmem:[%s150 + $0xc0] sm:$0xff] %v1960
      %2094 = vst.msk [vmem:[%s150 + $0xc8] sm:$0xff] %vm2069, %v1961
      %2095 = vst [vmem:[%s150 + $0xd0] sm:$0xff] %v1962
      %2096 = vst.msk [vmem:[%s150 + $0xd8] sm:$0xff] %vm2069, %v1963
      %2097 = vst [vmem:[%s150 + $0xe0] sm:$0xff] %v1964
      %2098 = vst.msk [vmem:[%s150 + $0xe8] sm:$0xff] %vm2069, %v1965
      %2099 = vst [vmem:[%s150 + $0xf0] sm:$0xff] %v1966
      %2100 = vst.msk [vmem:[%s150 + $0xf8] sm:$0xff] %vm2069, %v1967
      %2101 = vst [vmem:[%s150 + $0x100] sm:$0xff] %v1968
      %2102 = vst.msk [vmem:[%s150 + $0x108] sm:$0xff] %vm2069, %v1969
      %2103 = vst [vmem:[%s150 + $0x110] sm:$0xff] %v1970
      %2104 = vst.msk [vmem:[%s150 + $0x118] sm:$0xff] %vm2069, %v1971
      %2105 = vst [vmem:[%s150 + $0x120] sm:$0xff] %v1972
      %2106 = vst.msk [vmem:[%s150 + $0x128] sm:$0xff] %vm2069, %v1973
      %2107 = vst [vmem:[%s150 + $0x130] sm:$0xff] %v1974
      %2108 = vst.msk [vmem:[%s150 + $0x138] sm:$0xff] %vm2069, %v1975
      %2109 = vst [vmem:[%s150 + $0x140] sm:$0xff] %v1976
      %2110 = vst.msk [vmem:[%s150 + $0x148] sm:$0xff] %vm2069, %v1977
      %2111 = vst [vmem:[%s150 + $0x150] sm:$0xff] %v1978
      %2112 = vst.msk [vmem:[%s150 + $0x158] sm:$0xff] %vm2069, %v1979
      %2113 = vst [vmem:[%s150 + $0x160] sm:$0xff] %v1980
      %2114 = vst.msk [vmem:[%s150 + $0x168] sm:$0xff] %vm2069, %v1981
      %2115 = vst [vmem:[%s150 + $0x170] sm:$0xff] %v1982
      %2116 = vst.msk [vmem:[%s150 + $0x178] sm:$0xff] %vm2069, %v1983
      %2117 = vst [vmem:[%s150 + $0x180] sm:$0xff] %v1984
      %2118 = vst.msk [vmem:[%s150 + $0x188] sm:$0xff] %vm2069, %v1985
      %2119 = vst [vmem:[%s150 + $0x190] sm:$0xff] %v1986
      %2120 = vst.msk [vmem:[%s150 + $0x198] sm:$0xff] %vm2069, %v1987
      %2121 = vst [vmem:[%s150 + $0x1a0] sm:$0xff] %v1988
      %2122 = vst.msk [vmem:[%s150 + $0x1a8] sm:$0xff] %vm2069, %v1989
      %2123 = vst [vmem:[%s150 + $0x1b0] sm:$0xff] %v1990
      %2124 = vst.msk [vmem:[%s150 + $0x1b8] sm:$0xff] %vm2069, %v1991
      %2125 = vst [vmem:[%s150 + $0x1c0] sm:$0xff] %v1992
      %2126 = vst.msk [vmem:[%s150 + $0x1c8] sm:$0xff] %vm2069, %v1993
      %2127 = vst [vmem:[%s150 + $0x1d0] sm:$0xff] %v1994
      %2128 = vst.msk [vmem:[%s150 + $0x1d8] sm:$0xff] %vm2069, %v1995
      %2129 = vst [vmem:[%s150 + $0x1e0] sm:$0xff] %v1996
      %2130 = vst.msk [vmem:[%s150 + $0x1e8] sm:$0xff] %vm2069, %v1997
      %2131 = vst [vmem:[%s150 + $0x1f0] sm:$0xff] %v1998
      %2132 = vst.msk [vmem:[%s150 + $0x1f8] sm:$0xff] %vm2069, %v1999
      %2133 = vst [vmem:[%s150 + $0x200] sm:$0xff] %v2000
      %2134 = vst.msk [vmem:[%s150 + $0x208] sm:$0xff] %vm2069, %v2001
      %2135 = vst [vmem:[%s150 + $0x210] sm:$0xff] %v2002
      %2136 = vst.msk [vmem:[%s150 + $0x218] sm:$0xff] %vm2069, %v2003
      %2137 = vst [vmem:[%s150 + $0x220] sm:$0xff] %v2004
      %2138 = vst.msk [vmem:[%s150 + $0x228] sm:$0xff] %vm2069, %v2005
      %2139 = vst [vmem:[%s150 + $0x230] sm:$0xff] %v2006
      %2140 = vst.msk [vmem:[%s150 + $0x238] sm:$0xff] %vm2069, %v2007
      %2141 = vst [vmem:[%s150 + $0x240] sm:$0xff] %v2008
      %2142 = vst.msk [vmem:[%s150 + $0x248] sm:$0xff] %vm2069, %v2009
      %2143 = vst [vmem:[%s150 + $0x250] sm:$0xff] %v2010
      %2144 = vst.msk [vmem:[%s150 + $0x258] sm:$0xff] %vm2069, %v2011
      %2145 = vst [vmem:[%s150 + $0x260] sm:$0xff] %v2012
      %2146 = vst.msk [vmem:[%s150 + $0x268] sm:$0xff] %vm2069, %v2013
      %2147 = vst [vmem:[%s150 + $0x270] sm:$0xff] %v2014
      %2148 = vst.msk [vmem:[%s150 + $0x278] sm:$0xff] %vm2069, %v2015
      %2149 = vst [vmem:[%s150 + $0x280] sm:$0xff] %v2016
      %2150 = vst.msk [vmem:[%s150 + $0x288] sm:$0xff] %vm2069, %v2017
      %2151 = vst [vmem:[%s150 + $0x290] sm:$0xff] %v2018
      %2152 = vst.msk [vmem:[%s150 + $0x298] sm:$0xff] %vm2069, %v2019
      %2153 = vst [vmem:[%s150 + $0x2a0] sm:$0xff] %v2020
      %2154 = vst.msk [vmem:[%s150 + $0x2a8] sm:$0xff] %vm2069, %v2021
      %2155 = vst [vmem:[%s150 + $0x2b0] sm:$0xff] %v2022
      %2156 = vst.msk [vmem:[%s150 + $0x2b8] sm:$0xff] %vm2069, %v2023
      %2157 = vst [vmem:[%s150 + $0x2c0] sm:$0xff] %v2024
      %2158 = vst.msk [vmem:[%s150 + $0x2c8] sm:$0xff] %vm2069, %v2025
      %2159 = vst [vmem:[%s150 + $0x2d0] sm:$0xff] %v2026
      %2160 = vst.msk [vmem:[%s150 + $0x2d8] sm:$0xff] %vm2069, %v2027
      %2161 = vst [vmem:[%s150 + $0x2e0] sm:$0xff] %v2028
      %2162 = vst.msk [vmem:[%s150 + $0x2e8] sm:$0xff] %vm2069, %v2029
      %2163 = vst [vmem:[%s150 + $0x2f0] sm:$0xff] %v2030
      %2164 = vst.msk [vmem:[%s150 + $0x2f8] sm:$0xff] %vm2069, %v2031
      %2165 = vst [vmem:[%s150 + $0x300] sm:$0xff] %v2032
      %2166 = vst.msk [vmem:[%s150 + $0x308] sm:$0xff] %vm2069, %v2033
      %2167 = vst [vmem:[%s150 + $0x310] sm:$0xff] %v2034
      %2168 = vst.msk [vmem:[%s150 + $0x318] sm:$0xff] %vm2069, %v2035
      %2169 = vst [vmem:[%s150 + $0x320] sm:$0xff] %v2036
      %2170 = vst.msk [vmem:[%s150 + $0x328] sm:$0xff] %vm2069, %v2037
      %2171 = vst [vmem:[%s150 + $0x330] sm:$0xff] %v2038
      %2172 = vst.msk [vmem:[%s150 + $0x338] sm:$0xff] %vm2069, %v2039
      %2173 = vst [vmem:[%s150 + $0x340] sm:$0xff] %v2040
      %2174 = vst.msk [vmem:[%s150 + $0x348] sm:$0xff] %vm2069, %v2041
      %2175 = vst [vmem:[%s150 + $0x350] sm:$0xff] %v2042
      %2176 = vst.msk [vmem:[%s150 + $0x358] sm:$0xff] %vm2069, %v2043
      %2177 = vst [vmem:[%s150 + $0x360] sm:$0xff] %v2044
      %2178 = vst.msk [vmem:[%s150 + $0x368] sm:$0xff] %vm2069, %v2045
      %2179 = vst [vmem:[%s150 + $0x370] sm:$0xff] %v2046
      %2180 = vst.msk [vmem:[%s150 + $0x378] sm:$0xff] %vm2069, %v2047
      %2181 = vst [vmem:[%s150 + $0x380] sm:$0xff] %v2048
      %2182 = vst.msk [vmem:[%s150 + $0x388] sm:$0xff] %vm2069, %v2049
      %2183 = vst [vmem:[%s150 + $0x390] sm:$0xff] %v2050
      %2184 = vst.msk [vmem:[%s150 + $0x398] sm:$0xff] %vm2069, %v2051
      %2185 = vst [vmem:[%s150 + $0x3a0] sm:$0xff] %v2052
      %2186 = vst.msk [vmem:[%s150 + $0x3a8] sm:$0xff] %vm2069, %v2053
      %2187 = vst [vmem:[%s150 + $0x3b0] sm:$0xff] %v2054
      %2188 = vst.msk [vmem:[%s150 + $0x3b8] sm:$0xff] %vm2069, %v2055
      %2189 = vst [vmem:[%s150 + $0x3c0] sm:$0xff] %v2056
      %2190 = vst.msk [vmem:[%s150 + $0x3c8] sm:$0xff] %vm2069, %v2057
      %2191 = vst [vmem:[%s150 + $0x3d0] sm:$0xff] %v2058
      %2192 = vst.msk [vmem:[%s150 + $0x3d8] sm:$0xff] %vm2069, %v2059
      %2193 = vst [vmem:[%s150 + $0x3e0] sm:$0xff] %v2060
      %2194 = vst.msk [vmem:[%s150 + $0x3e8] sm:$0xff] %vm2069, %v2061
      %2195 = vst [vmem:[%s150 + $0x3f0] sm:$0xff] %v2062
      %2196 = vst.msk [vmem:[%s150 + $0x3f8] sm:$0xff] %vm2069, %v2063
      %2197 = vst [vmem:[%s150 + $0x400] sm:$0xff] %v2064
      %2198 = vst.msk [vmem:[%s150 + $0x408] sm:$0xff] %vm2069, %v2065
      %2199 = vst [vmem:[%s150 + $0x410] sm:$0xff] %v2066
      %2200 = vst.msk [vmem:[%s150 + $0x418] sm:$0xff] %vm2069, %v2067
      %s2201 = smul.u32 66, %s13
      %p2202 = scmp.lt.s32.totalorder %s2201, 131
      %s2203 = scalar_select %p2202, %s2201, 131
      %s2204 = smul.addr %s2203, 2
      %s2205 = smul.addr %s2204, 8
      %s2206 = scalar_lea.vmem %s2, %s2205
      // Predicated region
      $region29: #{tpu_custom_call.1} parent=27 // pred_check
        %p2207 = pneg %p78
      $region30: #{tpu_custom_call.1} parent=27 // pred_check_branch
        %2209 = sbr.rel (%p2207) target = $region32
      $region31: #{tpu_custom_call.1} parent=27 // pred_region
        %s2210 = smul.u32 66, %s13
      $region32: #{tpu_custom_call.1} parent=27 // pred_fallthru
        _
    $region28: #{tpu_custom_call.1} parent=5 // pred_fallthru
      _
    %p2211 = scmp.le.s32.totalorder 2, %s8
    // Predicated region
    $region33: #{tpu_custom_call.1} parent=5 // pred_check
      %p2212 = pneg %p2211
    $region34: #{tpu_custom_call.1} parent=5 // pred_check_branch
      %2214 = sbr.rel (%p2212) target = $region36
    $region35: #{tpu_custom_call.1} parent=5 // pred_region
      %s2215 = ssub.s32 %s8, 2
      // Predicated region
      $region37: #{tpu_custom_call.1} parent=35 // pred_check
        %p2216 = pneg %p84
      $region38: #{tpu_custom_call.1} parent=35 // pred_check_branch
        %2218 = sbr.rel (%p2216) target = $region40
      $region39: #{tpu_custom_call.1} parent=35 // pred_region
        %s2219 = smul.u32 66, %s14
        %p2220 = scmp.lt.s32.totalorder %s2219, 131
        %s2221 = scalar_select %p2220, %s2219, 131
        %s2222 = smul.addr %s2221, 2
        %s2223 = smul.addr %s2222, 8
        %s2224 = scalar_lea.vmem %s2, %s2223
      $region40: #{tpu_custom_call.1} parent=35 // pred_fallthru
        _
    $region36: #{tpu_custom_call.1} parent=5 // pred_fallthru
      _
  $region6: #{tpu_custom_call.1} parent=0 // loop_footer
    %s12 = sadd.s32 1, %s8
  $region7: #{tpu_custom_call.1} parent=0 // loop_footer_branch
    %7 = sbr.rel target = $region3
  $region8: #{tpu_custom_call.1} parent=0 // loop_exit
    _

</llo_original>
